<compile_context>
chip_gen: v7x
topology: tpu7x:2x2x1
jax: 0.10.0
libtpu: 0.0.40
codegen_flags: <defaults>
</compile_context>

<pallas_src>
import functools
import math

import jax
import jax.numpy as jnp
from jax.experimental import pallas as pl
from jax.experimental.pallas import tpu as pltpu


def _leaky_relu(x, slope=0.2):
    return jnp.where(x > 0, x, slope * x)


def sdf_kernel(xT_ref, zproj_ref, w_in_x_ref, w_h_ref, b_h_ref,
               w_sf_ref, b_s_ref, w_out_ref, b_out_ref, o_ref,
               *, num_hidden):
    """Whole MLP for one (batch, row-tile) block; activations are (H, tile_m)."""
    xT = xT_ref[0]                                    # (input_dim, tile_m)

    # fc_in: W_in_x @ x^T + (W_in_z @ z + b_in)  (latent part precomputed per batch)
    h = jnp.dot(w_in_x_ref[...], xT,
                preferred_element_type=jnp.float32) + zproj_ref[0]
    h = _leaky_relu(h)

    # hidden layers (small static unrolled loop)
    for i in range(num_hidden):
        h = jnp.dot(w_h_ref[i], h,
                    preferred_element_type=jnp.float32) + b_h_ref[i]
        h = _leaky_relu(h)
        if i > 0:
            # fused skip: h + (W_s h + b_s) == (W_s + I) h + b_s
            h = jnp.dot(w_sf_ref[i - 1], h,
                        preferred_element_type=jnp.float32) + b_s_ref[i - 1]

    # fc_out -> lane-dense (out_dim, tile_m) row
    out = jnp.dot(w_out_ref[...], h,
                  preferred_element_type=jnp.float32) + b_out_ref[...]
    o_ref[0] = out


def init_params(key, input_dim, latent_dim, hidden_dim, output_dim, num_layers):
    """nn.Linear-style init, weights kept in PyTorch (out, in) layout."""
    d_in = input_dim + latent_dim          # concatenated fc_in width (see NOTE above)
    n_hidden = num_layers - 1
    n_skip = n_hidden - 1
    assert n_skip >= 1, "need num_layers >= 3"

    def linear(k, fan_in, fan_out):
        kw, kb = jax.random.split(k)
        bound = 1.0 / math.sqrt(fan_in)
        w = jax.random.uniform(kw, (fan_out, fan_in), jnp.float32, -bound, bound)
        b = jax.random.uniform(kb, (fan_out,), jnp.float32, -bound, bound)
        return w, b

    keys = jax.random.split(key, 2 + n_hidden + n_skip)
    w_in, b_in = linear(keys[0], d_in, hidden_dim)
    w_h, b_h, w_s, b_s = [], [], [], []
    for i in range(n_hidden):
        w, b = linear(keys[1 + i], hidden_dim, hidden_dim)
        w_h.append(w); b_h.append(b)
    for i in range(n_skip):
        w, b = linear(keys[1 + n_hidden + i], hidden_dim, hidden_dim)
        w_s.append(w); b_s.append(b)
    w_out, b_out = linear(keys[-1], hidden_dim, output_dim)

    return dict(
        w_in=w_in, b_in=b_in,                              # (H, d_in), (H,)
        w_h=jnp.stack(w_h), b_h=jnp.stack(b_h)[:, :, None],  # (L-1,H,H), (L-1,H,1)
        w_s=jnp.stack(w_s), b_s=jnp.stack(b_s)[:, :, None],  # (L-2,H,H), (L-2,H,1)
        w_out=w_out, b_out=b_out[:, None],                 # (O,H), (O,1)
    )


def sdf_forward(x, z, params, *, tile_m=512):
    B, M, input_dim = x.shape
    assert M % tile_m == 0
    hidden = params["w_h"].shape[-1]
    out_dim = params["w_out"].shape[0]
    num_hidden = params["w_h"].shape[0]

    # Fold the latent half of fc_in (+ its bias) into a per-batch column; the
    # kernel then only streams the raw 3-wide points (no HBM concat).
    w_in = params["w_in"]
    w_in_x = w_in[:, :input_dim]                       # (H, input_dim)
    w_in_z = w_in[:, input_dim:]                       # (H, latent)
    zproj = (z @ w_in_z.T + params["b_in"])[:, :, None]  # (B, H, 1)

    # Fuse skip: (W_s + I)
    w_s_fused = params["w_s"] + jnp.eye(hidden, dtype=params["w_s"].dtype)[None]

    # Feature-major layout: rows on the lane axis.
    xT = jnp.swapaxes(x, 1, 2)                         # (B, input_dim, M)

    kernel = functools.partial(sdf_kernel, num_hidden=num_hidden)

    # TODO(synk): weights could use pipeline_mode=pl.Buffered(1); constant
    # index_maps already keep them resident, so this is left out for safety.
    out = pl.pallas_call(
        kernel,
        out_shape=jax.ShapeDtypeStruct((B, out_dim, M), jnp.float32),
        grid_spec=pltpu.PrefetchScalarGridSpec(
            num_scalar_prefetch=0,
            grid=(B, M // tile_m),
            in_specs=[
                pl.BlockSpec((1, input_dim, tile_m), lambda b, j: (b, 0, j)),
                pl.BlockSpec((1, hidden, 1), lambda b, j: (b, 0, 0)),
                pl.BlockSpec(w_in_x.shape, lambda b, j: (0, 0)),
                pl.BlockSpec(params["w_h"].shape, lambda b, j: (0, 0, 0)),
                pl.BlockSpec(params["b_h"].shape, lambda b, j: (0, 0, 0)),
                pl.BlockSpec(w_s_fused.shape, lambda b, j: (0, 0, 0)),
                pl.BlockSpec(params["b_s"].shape, lambda b, j: (0, 0, 0)),
                pl.BlockSpec(params["w_out"].shape, lambda b, j: (0, 0)),
                pl.BlockSpec(params["b_out"].shape, lambda b, j: (0, 0)),
            ],
            out_specs=pl.BlockSpec((1, out_dim, tile_m), lambda b, j: (b, 0, j)),
        ),
        compiler_params=pltpu.CompilerParams(
            dimension_semantics=("parallel", "parallel")),
    )(xT, zproj, w_in_x, params["w_h"], params["b_h"],
      w_s_fused, params["b_s"], params["w_out"], params["b_out"])

    return jnp.swapaxes(out, 1, 2)                     # (B, M, out_dim)


def sdf_reference(x, z, params):
    """Pure-JAX reference mirroring the PyTorch forward (unfused)."""
    B, M, _ = x.shape
    z_exp = jnp.broadcast_to(z[:, None, :], (B, M, z.shape[-1]))
    h = jnp.concatenate([x, z_exp], axis=-1).reshape(B * M, -1)
    h = _leaky_relu(h @ params["w_in"].T + params["b_in"])
    for i in range(params["w_h"].shape[0]):
        h = _leaky_relu(h @ params["w_h"][i].T + params["b_h"][i][:, 0])
        if i > 0:
            h = h + (h @ params["w_s"][i - 1].T + params["b_s"][i - 1][:, 0])
    h = h @ params["w_out"].T + params["b_out"][:, 0]
    return h.reshape(B, M, -1)


if __name__ == "__main__":
    # small shapes consistent with the module
    B, M = 2, 1024
    input_dim, latent_dim, hidden_dim, output_dim, num_layers = 3, 16, 32, 1, 4
    tile_m = 512                      # grid = (2, 2): large tiles, >=2 steps for v7x

    key = jax.random.PRNGKey(0)
    kx, kz, kp = jax.random.split(key, 3)
    x = jax.random.normal(kx, (B, M, input_dim), jnp.float32)
    z = jax.random.normal(kz, (B, latent_dim), jnp.float32)
    params = init_params(kp, input_dim, latent_dim, hidden_dim, output_dim,
                         num_layers)

    out = sdf_forward(x, z, params, tile_m=tile_m)
    out = jax.block_until_ready(out)

    ref = sdf_reference(x, z, params)
    assert out.shape == (B, M, output_dim)
    assert jnp.allclose(out, ref, atol=1e-4, rtol=1e-4), "mismatch vs reference"

    print("KERNEL_OK")
</pallas_src>

<mosaic_0001>
module attributes {stable_mosaic.version = 11 : i64} {
  func.func @sdf_kernel(%arg0: i32, %arg1: i32, %arg2: memref<1x3x512xf32, #tpu.memory_space<vmem>>, %arg3: memref<1x32x1xf32, #tpu.memory_space<vmem>>, %arg4: memref<32x3xf32, #tpu.memory_space<vmem>>, %arg5: memref<3x32x32xf32, #tpu.memory_space<vmem>>, %arg6: memref<3x32x1xf32, #tpu.memory_space<vmem>>, %arg7: memref<2x32x32xf32, #tpu.memory_space<vmem>>, %arg8: memref<2x32x1xf32, #tpu.memory_space<vmem>>, %arg9: memref<1x32xf32, #tpu.memory_space<vmem>>, %arg10: memref<1x1xf32, #tpu.memory_space<vmem>>, %arg11: memref<1x1x512xf32, #tpu.memory_space<vmem>>) attributes {dimension_semantics = [#tpu.dimension_semantics<parallel>, #tpu.dimension_semantics<parallel>], iteration_bounds = array<i64: 2, 2>, scalar_prefetch = 0 : i64, scratch_operands = 0 : i64, tpu.core_type = #tpu.core_type<tc>, window_params = [{transform_indices = @transform_0, window_bounds = array<i64: 1, 3, 512>}, {transform_indices = @transform_1, window_bounds = array<i64: 1, 32, 1>}, {pipeline_mode = #tpu.pipeline_mode<synchronous>, transform_indices = @transform_2, window_bounds = array<i64: 32, 3>}, {pipeline_mode = #tpu.pipeline_mode<synchronous>, transform_indices = @transform_3, window_bounds = array<i64: 3, 32, 32>}, {pipeline_mode = #tpu.pipeline_mode<synchronous>, transform_indices = @transform_4, window_bounds = array<i64: 3, 32, 1>}, {pipeline_mode = #tpu.pipeline_mode<synchronous>, transform_indices = @transform_5, window_bounds = array<i64: 2, 32, 32>}, {pipeline_mode = #tpu.pipeline_mode<synchronous>, transform_indices = @transform_6, window_bounds = array<i64: 2, 32, 1>}, {pipeline_mode = #tpu.pipeline_mode<synchronous>, transform_indices = @transform_7, window_bounds = array<i64: 1, 32>}, {pipeline_mode = #tpu.pipeline_mode<synchronous>, transform_indices = @transform_8, window_bounds = array<i64: 1, 1>}, {transform_indices = @transform_9, window_bounds = array<i64: 1, 1, 512>}]} {
    %c0 = arith.constant 0 : index
    %c0_0 = arith.constant 0 : index
    %c0_1 = arith.constant 0 : index
    %0 = vector.load %arg2[%c0, %c0_0, %c0_1] : memref<1x3x512xf32, #tpu.memory_space<vmem>>, vector<1x3x512xf32>
    %1 = vector.shape_cast %0 : vector<1x3x512xf32> to vector<3x512xf32>
    %c0_2 = arith.constant 0 : index
    %c0_3 = arith.constant 0 : index
    %2 = vector.load %arg4[%c0_2, %c0_3] : memref<32x3xf32, #tpu.memory_space<vmem>>, vector<32x3xf32>
    %cst = arith.constant dense<0.000000e+00> : vector<32x512xf32>
    %3 = tpu.matmul %2, %1, %cst {dimension_numbers = #tpu.dot_dimension_numbers<[1], [0], [0], [1], [0, 0, 1, 1], [], []>} : vector<32x3xf32>, vector<3x512xf32>, vector<32x512xf32> -> vector<32x512xf32>
    %c0_4 = arith.constant 0 : index
    %c0_5 = arith.constant 0 : index
    %c0_6 = arith.constant 0 : index
    %4 = vector.load %arg3[%c0_4, %c0_5, %c0_6] : memref<1x32x1xf32, #tpu.memory_space<vmem>>, vector<1x32x1xf32>
    %5 = vector.shape_cast %4 : vector<1x32x1xf32> to vector<32x1xf32>
    %6 = vector.broadcast %5 : vector<32x1xf32> to vector<32x512xf32>
    %7 = arith.addf %3, %6 : vector<32x512xf32>
    %cst_7 = arith.constant 0.000000e+00 : f32
    %8 = vector.broadcast %cst_7 : f32 to vector<32x512xf32>
    %9 = arith.cmpf ogt, %7, %8 : vector<32x512xf32>
    %cst_8 = arith.constant 2.000000e-01 : f32
    %10 = vector.broadcast %cst_8 : f32 to vector<32x512xf32>
    %11 = arith.mulf %10, %7 : vector<32x512xf32>
    %12 = arith.select %9, %7, %11 : vector<32x512xi1>, vector<32x512xf32>
    %c0_9 = arith.constant 0 : index
    %c0_10 = arith.constant 0 : index
    %c0_11 = arith.constant 0 : index
    %13 = vector.load %arg5[%c0_9, %c0_10, %c0_11] : memref<3x32x32xf32, #tpu.memory_space<vmem>>, vector<1x32x32xf32>
    %14 = vector.shape_cast %13 : vector<1x32x32xf32> to vector<32x32xf32>
    %cst_12 = arith.constant dense<0.000000e+00> : vector<32x512xf32>
    %15 = tpu.matmul %14, %12, %cst_12 {dimension_numbers = #tpu.dot_dimension_numbers<[1], [0], [0], [1], [0, 0, 1, 1], [], []>} : vector<32x32xf32>, vector<32x512xf32>, vector<32x512xf32> -> vector<32x512xf32>
    %c0_13 = arith.constant 0 : index
    %c0_14 = arith.constant 0 : index
    %c0_15 = arith.constant 0 : index
    %16 = vector.load %arg6[%c0_13, %c0_14, %c0_15] : memref<3x32x1xf32, #tpu.memory_space<vmem>>, vector<1x32x1xf32>
    %17 = vector.shape_cast %16 : vector<1x32x1xf32> to vector<32x1xf32>
    %18 = vector.broadcast %17 : vector<32x1xf32> to vector<32x512xf32>
    %19 = arith.addf %15, %18 : vector<32x512xf32>
    %cst_16 = arith.constant 0.000000e+00 : f32
    %20 = vector.broadcast %cst_16 : f32 to vector<32x512xf32>
    %21 = arith.cmpf ogt, %19, %20 : vector<32x512xf32>
    %cst_17 = arith.constant 2.000000e-01 : f32
    %22 = vector.broadcast %cst_17 : f32 to vector<32x512xf32>
    %23 = arith.mulf %22, %19 : vector<32x512xf32>
    %24 = arith.select %21, %19, %23 : vector<32x512xi1>, vector<32x512xf32>
    %c1 = arith.constant 1 : index
    %c0_18 = arith.constant 0 : index
    %c0_19 = arith.constant 0 : index
    %25 = vector.load %arg5[%c1, %c0_18, %c0_19] : memref<3x32x32xf32, #tpu.memory_space<vmem>>, vector<1x32x32xf32>
    %26 = vector.shape_cast %25 : vector<1x32x32xf32> to vector<32x32xf32>
    %cst_20 = arith.constant dense<0.000000e+00> : vector<32x512xf32>
    %27 = tpu.matmul %26, %24, %cst_20 {dimension_numbers = #tpu.dot_dimension_numbers<[1], [0], [0], [1], [0, 0, 1, 1], [], []>} : vector<32x32xf32>, vector<32x512xf32>, vector<32x512xf32> -> vector<32x512xf32>
    %c1_21 = arith.constant 1 : index
    %c0_22 = arith.constant 0 : index
    %c0_23 = arith.constant 0 : index
    %28 = vector.load %arg6[%c1_21, %c0_22, %c0_23] : memref<3x32x1xf32, #tpu.memory_space<vmem>>, vector<1x32x1xf32>
    %29 = vector.shape_cast %28 : vector<1x32x1xf32> to vector<32x1xf32>
    %30 = vector.broadcast %29 : vector<32x1xf32> to vector<32x512xf32>
    %31 = arith.addf %27, %30 : vector<32x512xf32>
    %cst_24 = arith.constant 0.000000e+00 : f32
    %32 = vector.broadcast %cst_24 : f32 to vector<32x512xf32>
    %33 = arith.cmpf ogt, %31, %32 : vector<32x512xf32>
    %cst_25 = arith.constant 2.000000e-01 : f32
    %34 = vector.broadcast %cst_25 : f32 to vector<32x512xf32>
    %35 = arith.mulf %34, %31 : vector<32x512xf32>
    %36 = arith.select %33, %31, %35 : vector<32x512xi1>, vector<32x512xf32>
    %c0_26 = arith.constant 0 : index
    %c0_27 = arith.constant 0 : index
    %c0_28 = arith.constant 0 : index
    %37 = vector.load %arg7[%c0_26, %c0_27, %c0_28] : memref<2x32x32xf32, #tpu.memory_space<vmem>>, vector<1x32x32xf32>
    %38 = vector.shape_cast %37 : vector<1x32x32xf32> to vector<32x32xf32>
    %cst_29 = arith.constant dense<0.000000e+00> : vector<32x512xf32>
    %39 = tpu.matmul %38, %36, %cst_29 {dimension_numbers = #tpu.dot_dimension_numbers<[1], [0], [0], [1], [0, 0, 1, 1], [], []>} : vector<32x32xf32>, vector<32x512xf32>, vector<32x512xf32> -> vector<32x512xf32>
    %c0_30 = arith.constant 0 : index
    %c0_31 = arith.constant 0 : index
    %c0_32 = arith.constant 0 : index
    %40 = vector.load %arg8[%c0_30, %c0_31, %c0_32] : memref<2x32x1xf32, #tpu.memory_space<vmem>>, vector<1x32x1xf32>
    %41 = vector.shape_cast %40 : vector<1x32x1xf32> to vector<32x1xf32>
    %42 = vector.broadcast %41 : vector<32x1xf32> to vector<32x512xf32>
    %43 = arith.addf %39, %42 : vector<32x512xf32>
    %c2 = arith.constant 2 : index
    %c0_33 = arith.constant 0 : index
    %c0_34 = arith.constant 0 : index
    %44 = vector.load %arg5[%c2, %c0_33, %c0_34] : memref<3x32x32xf32, #tpu.memory_space<vmem>>, vector<1x32x32xf32>
    %45 = vector.shape_cast %44 : vector<1x32x32xf32> to vector<32x32xf32>
    %cst_35 = arith.constant dense<0.000000e+00> : vector<32x512xf32>
    %46 = tpu.matmul %45, %43, %cst_35 {dimension_numbers = #tpu.dot_dimension_numbers<[1], [0], [0], [1], [0, 0, 1, 1], [], []>} : vector<32x32xf32>, vector<32x512xf32>, vector<32x512xf32> -> vector<32x512xf32>
    %c2_36 = arith.constant 2 : index
    %c0_37 = arith.constant 0 : index
    %c0_38 = arith.constant 0 : index
    %47 = vector.load %arg6[%c2_36, %c0_37, %c0_38] : memref<3x32x1xf32, #tpu.memory_space<vmem>>, vector<1x32x1xf32>
    %48 = vector.shape_cast %47 : vector<1x32x1xf32> to vector<32x1xf32>
    %49 = vector.broadcast %48 : vector<32x1xf32> to vector<32x512xf32>
    %50 = arith.addf %46, %49 : vector<32x512xf32>
    %cst_39 = arith.constant 0.000000e+00 : f32
    %51 = vector.broadcast %cst_39 : f32 to vector<32x512xf32>
    %52 = arith.cmpf ogt, %50, %51 : vector<32x512xf32>
    %cst_40 = arith.constant 2.000000e-01 : f32
    %53 = vector.broadcast %cst_40 : f32 to vector<32x512xf32>
    %54 = arith.mulf %53, %50 : vector<32x512xf32>
    %55 = arith.select %52, %50, %54 : vector<32x512xi1>, vector<32x512xf32>
    %c1_41 = arith.constant 1 : index
    %c0_42 = arith.constant 0 : index
    %c0_43 = arith.constant 0 : index
    %56 = vector.load %arg7[%c1_41, %c0_42, %c0_43] : memref<2x32x32xf32, #tpu.memory_space<vmem>>, vector<1x32x32xf32>
    %57 = vector.shape_cast %56 : vector<1x32x32xf32> to vector<32x32xf32>
    %cst_44 = arith.constant dense<0.000000e+00> : vector<32x512xf32>
    %58 = tpu.matmul %57, %55, %cst_44 {dimension_numbers = #tpu.dot_dimension_numbers<[1], [0], [0], [1], [0, 0, 1, 1], [], []>} : vector<32x32xf32>, vector<32x512xf32>, vector<32x512xf32> -> vector<32x512xf32>
    %c1_45 = arith.constant 1 : index
    %c0_46 = arith.constant 0 : index
    %c0_47 = arith.constant 0 : index
    %59 = vector.load %arg8[%c1_45, %c0_46, %c0_47] : memref<2x32x1xf32, #tpu.memory_space<vmem>>, vector<1x32x1xf32>
    %60 = vector.shape_cast %59 : vector<1x32x1xf32> to vector<32x1xf32>
    %61 = vector.broadcast %60 : vector<32x1xf32> to vector<32x512xf32>
    %62 = arith.addf %58, %61 : vector<32x512xf32>
    %c0_48 = arith.constant 0 : index
    %c0_49 = arith.constant 0 : index
    %63 = vector.load %arg9[%c0_48, %c0_49] : memref<1x32xf32, #tpu.memory_space<vmem>>, vector<1x32xf32>
    %cst_50 = arith.constant dense<0.000000e+00> : vector<1x512xf32>
    %64 = tpu.matmul %63, %62, %cst_50 {dimension_numbers = #tpu.dot_dimension_numbers<[1], [0], [0], [1], [0, 0, 1, 1], [], []>} : vector<1x32xf32>, vector<32x512xf32>, vector<1x512xf32> -> vector<1x512xf32>
    %c0_51 = arith.constant 0 : index
    %c0_52 = arith.constant 0 : index
    %65 = vector.load %arg10[%c0_51, %c0_52] : memref<1x1xf32, #tpu.memory_space<vmem>>, vector<1x1xf32>
    %66 = vector.broadcast %65 : vector<1x1xf32> to vector<1x512xf32>
    %67 = arith.addf %64, %66 : vector<1x512xf32>
    %c0_53 = arith.constant 0 : index
    %c0_54 = arith.constant 0 : index
    %c0_55 = arith.constant 0 : index
    %68 = vector.load %arg11[%c0_53, %c0_54, %c0_55] : memref<1x1x512xf32, #tpu.memory_space<vmem>>, vector<1x1x512xf32>
    %69 = vector.shape_cast %68 : vector<1x1x512xf32> to vector<1x512xf32>
    %70 = vector.shape_cast %67 : vector<1x512xf32> to vector<1x1x512xf32>
    tpu.vector_store %arg11[%c0_53, %c0_54, %c0_55], %70 {strides = array<i32>} : memref<1x1x512xf32, #tpu.memory_space<vmem>>, vector<1x1x512xf32>,
    return
  }
  func.func @transform_0(%arg0: i32, %arg1: i32) -> (i32, i32, i32) {
    %c0_i32 = arith.constant 0 : i32
    %c0_i32_0 = arith.constant 0 : i32
    return %arg0, %c0_i32, %arg1 : i32, i32, i32
  }
  func.func @transform_1(%arg0: i32, %arg1: i32) -> (i32, i32, i32) {
    %c0_i32 = arith.constant 0 : i32
    %c0_i32_0 = arith.constant 0 : i32
    %c0_i32_1 = arith.constant 0 : i32
    return %arg0, %c0_i32, %c0_i32_0 : i32, i32, i32
  }
  func.func @transform_2(%arg0: i32, %arg1: i32) -> (i32, i32) {
    %c0_i32 = arith.constant 0 : i32
    %c0_i32_0 = arith.constant 0 : i32
    %c0_i32_1 = arith.constant 0 : i32
    return %c0_i32, %c0_i32_0 : i32, i32
  }
  func.func @transform_3(%arg0: i32, %arg1: i32) -> (i32, i32, i32) {
    %c0_i32 = arith.constant 0 : i32
    %c0_i32_0 = arith.constant 0 : i32
    %c0_i32_1 = arith.constant 0 : i32
    %c0_i32_2 = arith.constant 0 : i32
    return %c0_i32, %c0_i32_0, %c0_i32_1 : i32, i32, i32
  }
  func.func @transform_4(%arg0: i32, %arg1: i32) -> (i32, i32, i32) {
    %c0_i32 = arith.constant 0 : i32
    %c0_i32_0 = arith.constant 0 : i32
    %c0_i32_1 = arith.constant 0 : i32
    %c0_i32_2 = arith.constant 0 : i32
    return %c0_i32, %c0_i32_0, %c0_i32_1 : i32, i32, i32
  }
  func.func @transform_5(%arg0: i32, %arg1: i32) -> (i32, i32, i32) {
    %c0_i32 = arith.constant 0 : i32
    %c0_i32_0 = arith.constant 0 : i32
    %c0_i32_1 = arith.constant 0 : i32
    %c0_i32_2 = arith.constant 0 : i32
    return %c0_i32, %c0_i32_0, %c0_i32_1 : i32, i32, i32
  }
  func.func @transform_6(%arg0: i32, %arg1: i32) -> (i32, i32, i32) {
    %c0_i32 = arith.constant 0 : i32
    %c0_i32_0 = arith.constant 0 : i32
    %c0_i32_1 = arith.constant 0 : i32
    %c0_i32_2 = arith.constant 0 : i32
    return %c0_i32, %c0_i32_0, %c0_i32_1 : i32, i32, i32
  }
  func.func @transform_7(%arg0: i32, %arg1: i32) -> (i32, i32) {
    %c0_i32 = arith.constant 0 : i32
    %c0_i32_0 = arith.constant 0 : i32
    %c0_i32_1 = arith.constant 0 : i32
    return %c0_i32, %c0_i32_0 : i32, i32
  }
  func.func @transform_8(%arg0: i32, %arg1: i32) -> (i32, i32) {
    %c0_i32 = arith.constant 0 : i32
    %c0_i32_0 = arith.constant 0 : i32
    %c0_i32_1 = arith.constant 0 : i32
    return %c0_i32, %c0_i32_0 : i32, i32
  }
  func.func @transform_9(%arg0: i32, %arg1: i32) -> (i32, i32, i32) {
    %c0_i32 = arith.constant 0 : i32
    %c0_i32_0 = arith.constant 0 : i32
    return %arg0, %c0_i32, %arg1 : i32, i32, i32
  }
}

</mosaic_0001>

<llo_original>
// kernel: tpu_custom_call.1
$region0: #{tpu_custom_call.1}
  #allocation0 [shape = 'u32[]', space=smem, size = 0x4, offset = 0x4, fixed_abs, tag = 'smem constant byte address 0x4 - core index']
  #allocation1 [shape = 'u32[144,128]{1,0:T(1,128)}', space=vmem, size = 0x12000, scoped, tag = 'internal scratch']
  #allocation2 [shape = 'f32[1,1]{1,0:T(1,128)S(1)}', space=vmem, size = 0x200, scoped, tag = 'scoped memory for tpu_custom_call.1']
  %s0 = inlined_call_operand.vmem [shape: f32[2,3,1024], index: 0, kind: input, shape index: {}]
  %s1 = inlined_call_operand.vmem [shape: f32[2,32,1], index: 1, kind: input, shape index: {}]
  %s2 = inlined_call_operand.vmem [shape: f32[32,3], index: 2, kind: input, shape index: {}]
  %s3 = inlined_call_operand.vmem [shape: f32[3,32,32], index: 3, kind: input, shape index: {}]
  %s4 = inlined_call_operand.vmem [shape: f32[3,32,1], index: 4, kind: input, shape index: {}]
  %s5 = inlined_call_operand.vmem [shape: f32[2,32,32], index: 5, kind: input, shape index: {}]
  %s6 = inlined_call_operand.vmem [shape: f32[2,32,1], index: 6, kind: input, shape index: {}]
  %s7 = inlined_call_operand.vmem [shape: f32[1,32], index: 7, kind: input, shape index: {}]
  %s8 = inlined_call_operand.<no memory space> [shape: f32[1,1], index: 8, kind: input, shape index: {}]
  %s9 = inlined_call_operand.hbm [shape: f32[2,1,1024], index: 9, kind: output, shape index: {}]
  %s10 = sld [smem:[#allocation0]]
  $region69: #{tpu_custom_call.1} parent=0
    _
  %s12 = ssub.s32 1, %s10
  %s13 = scalar_select 0, %s12, %s10
  %v14 = vstv %s8
  %15 = vst [vmem:[#allocation2] sm:$0x1] %v14
  $region1: #{tpu_custom_call.1} parent=0
    #allocation3 [shape = 'u8[4096]{0}', space=vmem, size = 0x1000, scoped, tag = 'output window, operand 0']
    #allocation4 [shape = 's32[2]{0}', space=sflag, size = 0x8, scoped, tag = 'scoped memory for tpu_custom_call.1']
    %16 = vsyncpa [#allocation4], 0
    %s17 = scalar_lea.sflag [#allocation4], 1
    %18 = vsyncpa %s17, 0
    loop: start=0, step=1, limit=6
    $region2: #{tpu_custom_call.1} parent=1 // loop_pre_header
      _
    $region3: #{tpu_custom_call.1} parent=1 // loop_header
      %s20 = sphi 0, %s24
      %p21 = scmp.ge.s32.totalorder %s20, 6
      %s27 = sphi 0, %s39
      %s28 = sphi 0, %s35
      %s29 = sphi 0, %s27
      %s30 = sphi 0, %s28
      %s31 = sphi 0, %s29
      %s32 = sphi 0, %s30
      %s44 = sphi 0, %s46
      %s47 = sphi 0, %s44
      %s48 = sphi 0, %s47
      %s64 = sphi 0, %s48
      %s70 = sphi 0, %s72
      %s73 = sphi 0, %s70
      %s74 = sphi 0, %s73
      %s90 = sphi 0, %s74
      %s94 = sphi 0, %s94
      %s96 = sphi 0, %s94
      %s97 = sphi 0, %s96
      %s111 = sphi 0, %s97
      %s115 = sphi 0, %s115
      %s117 = sphi 0, %s115
      %s118 = sphi 0, %s117
      %s132 = sphi 0, %s118
      %s136 = sphi 0, %s136
      %s138 = sphi 0, %s136
      %s139 = sphi 0, %s138
      %s153 = sphi 0, %s139
      %s157 = sphi 0, %s157
      %s159 = sphi 0, %s157
      %s160 = sphi 0, %s159
      %s174 = sphi 0, %s160
      %s178 = sphi 0, %s178
      %s180 = sphi 0, %s178
      %s181 = sphi 0, %s180
      %s195 = sphi 0, %s181
      %s199 = sphi 0, %s199
      %s201 = sphi 0, %s199
      %s202 = sphi 0, %s201
      %s216 = sphi 0, %s202
      %s220 = sphi 0, %s220
      %s222 = sphi 0, %s220
      %s223 = sphi 0, %s222
      %s237 = sphi 0, %s223
      %s245 = sphi 0, %s247
      %s248 = sphi 0, %s245
      %s249 = sphi 0, %s248
      %s265 = sphi 0, %s249
    $region4: #{tpu_custom_call.1} parent=1 // loop_header_branch
      %23 = sbr.rel (%p21) target = $region8
    $region5: #{tpu_custom_call.1} parent=1 // loop_body
      %s25 = ssub.s32 %s20, 1
      %s26 = ssub.s32 %s20, 2
      %s33 = sadd.s32 1, %s28
      %p34 = scmp.ge.s32.totalorder %s33, 2
      %s35 = scalar_select %p34, 0, %s33
      %s36 = sadd.s32 1, %s27
      %s37 = scalar_select %p34, %s36, %s27
      %p38 = scmp.ge.s32.totalorder %s37, 2
      %s39 = scalar_select %p38, 0, %s37
      %s40 = ssub.s32 %s27, %s39
      %s41 = ssub.s32 %s28, %s35
      %s42 = sor.u32 %s40, %s41
      %p43 = scmp.eq.s32.totalorder %s42, 0
      %s45 = sadd.s32 %s44, 1
      %s46 = scalar_select %p43, %s44, %s45
      %p49 = pneg %p43
      %p50 = scmp.eq.s32.totalorder %s20, 3
      %p51 = por %p49, %p50
      %p52 = scmp.ne.s32.totalorder %s44, %s47
      %p53 = scmp.eq.s32.totalorder %s20, 0
      %p54 = por %p52, %p53
      %p55 = scmp.ne.s32.totalorder %s44, %s47
      %p56 = scmp.eq.s32.totalorder %s25, 3
      %p57 = por %p55, %p56
      %p58 = scmp.ne.s32.totalorder %s47, %s48
      %p59 = scmp.eq.s32.totalorder %s25, 0
      %p60 = por %p58, %p59
      %p61 = scmp.ne.s32.totalorder %s47, %s48
      %p62 = scmp.eq.s32.totalorder %s26, 3
      %p63 = por %p61, %p62
      %p65 = scmp.ne.s32.totalorder %s48, %s64
      %p66 = scmp.eq.s32.totalorder %s26, 0
      %p67 = por %p65, %p66
      %s68 = ssub.s32 %s27, %s39
      %p69 = scmp.eq.s32.totalorder %s68, 0
      %s71 = sadd.s32 %s70, 1
      %s72 = scalar_select %p69, %s70, %s71
      %p75 = pneg %p69
      %p76 = scmp.eq.s32.totalorder %s20, 3
      %p77 = por %p75, %p76
      %p78 = scmp.ne.s32.totalorder %s70, %s73
      %p79 = scmp.eq.s32.totalorder %s20, 0
      %p80 = por %p78, %p79
      %p81 = scmp.ne.s32.totalorder %s70, %s73
      %p82 = scmp.eq.s32.totalorder %s25, 3
      %p83 = por %p81, %p82
      %p84 = scmp.ne.s32.totalorder %s73, %s74
      %p85 = scmp.eq.s32.totalorder %s25, 0
      %p86 = por %p84, %p85
      %p87 = scmp.ne.s32.totalorder %s73, %s74
      %p88 = scmp.eq.s32.totalorder %s26, 3
      %p89 = por %p87, %p88
      %p91 = scmp.ne.s32.totalorder %s74, %s90
      %p92 = scmp.eq.s32.totalorder %s26, 0
      %p93 = por %p91, %p92
      %s95 = sadd.s32 %s94, 1
      %p98 = scmp.eq.s32.totalorder %s20, 3
      %p99 = scmp.ne.s32.totalorder %s94, %s96
      %p100 = scmp.eq.s32.totalorder %s20, 0
      %p101 = por %p99, %p100
      %p102 = scmp.ne.s32.totalorder %s94, %s96
      %p103 = scmp.eq.s32.totalorder %s25, 3
      %p104 = por %p102, %p103
      %p105 = scmp.ne.s32.totalorder %s96, %s97
      %p106 = scmp.eq.s32.totalorder %s25, 0
      %p107 = por %p105, %p106
      %p108 = scmp.ne.s32.totalorder %s96, %s97
      %p109 = scmp.eq.s32.totalorder %s26, 3
      %p110 = por %p108, %p109
      %p112 = scmp.ne.s32.totalorder %s97, %s111
      %p113 = scmp.eq.s32.totalorder %s26, 0
      %p114 = por %p112, %p113
      %s116 = sadd.s32 %s115, 1
      %p119 = scmp.eq.s32.totalorder %s20, 3
      %p120 = scmp.ne.s32.totalorder %s115, %s117
      %p121 = scmp.eq.s32.totalorder %s20, 0
      %p122 = por %p120, %p121
      %p123 = scmp.ne.s32.totalorder %s115, %s117
      %p124 = scmp.eq.s32.totalorder %s25, 3
      %p125 = por %p123, %p124
      %p126 = scmp.ne.s32.totalorder %s117, %s118
      %p127 = scmp.eq.s32.totalorder %s25, 0
      %p128 = por %p126, %p127
      %p129 = scmp.ne.s32.totalorder %s117, %s118
      %p130 = scmp.eq.s32.totalorder %s26, 3
      %p131 = por %p129, %p130
      %p133 = scmp.ne.s32.totalorder %s118, %s132
      %p134 = scmp.eq.s32.totalorder %s26, 0
      %p135 = por %p133, %p134
      %s137 = sadd.s32 %s136, 1
      %p140 = scmp.eq.s32.totalorder %s20, 3
      %p141 = scmp.ne.s32.totalorder %s136, %s138
      %p142 = scmp.eq.s32.totalorder %s20, 0
      %p143 = por %p141, %p142
      %p144 = scmp.ne.s32.totalorder %s136, %s138
      %p145 = scmp.eq.s32.totalorder %s25, 3
      %p146 = por %p144, %p145
      %p147 = scmp.ne.s32.totalorder %s138, %s139
      %p148 = scmp.eq.s32.totalorder %s25, 0
      %p149 = por %p147, %p148
      %p150 = scmp.ne.s32.totalorder %s138, %s139
      %p151 = scmp.eq.s32.totalorder %s26, 3
      %p152 = por %p150, %p151
      %p154 = scmp.ne.s32.totalorder %s139, %s153
      %p155 = scmp.eq.s32.totalorder %s26, 0
      %p156 = por %p154, %p155
      %s158 = sadd.s32 %s157, 1
      %p161 = scmp.eq.s32.totalorder %s20, 3
      %p162 = scmp.ne.s32.totalorder %s157, %s159
      %p163 = scmp.eq.s32.totalorder %s20, 0
      %p164 = por %p162, %p163
      %p165 = scmp.ne.s32.totalorder %s157, %s159
      %p166 = scmp.eq.s32.totalorder %s25, 3
      %p167 = por %p165, %p166
      %p168 = scmp.ne.s32.totalorder %s159, %s160
      %p169 = scmp.eq.s32.totalorder %s25, 0
      %p170 = por %p168, %p169
      %p171 = scmp.ne.s32.totalorder %s159, %s160
      %p172 = scmp.eq.s32.totalorder %s26, 3
      %p173 = por %p171, %p172
      %p175 = scmp.ne.s32.totalorder %s160, %s174
      %p176 = scmp.eq.s32.totalorder %s26, 0
      %p177 = por %p175, %p176
      %s179 = sadd.s32 %s178, 1
      %p182 = scmp.eq.s32.totalorder %s20, 3
      %p183 = scmp.ne.s32.totalorder %s178, %s180
      %p184 = scmp.eq.s32.totalorder %s20, 0
      %p185 = por %p183, %p184
      %p186 = scmp.ne.s32.totalorder %s178, %s180
      %p187 = scmp.eq.s32.totalorder %s25, 3
      %p188 = por %p186, %p187
      %p189 = scmp.ne.s32.totalorder %s180, %s181
      %p190 = scmp.eq.s32.totalorder %s25, 0
      %p191 = por %p189, %p190
      %p192 = scmp.ne.s32.totalorder %s180, %s181
      %p193 = scmp.eq.s32.totalorder %s26, 3
      %p194 = por %p192, %p193
      %p196 = scmp.ne.s32.totalorder %s181, %s195
      %p197 = scmp.eq.s32.totalorder %s26, 0
      %p198 = por %p196, %p197
      %s200 = sadd.s32 %s199, 1
      %p203 = scmp.eq.s32.totalorder %s20, 3
      %p204 = scmp.ne.s32.totalorder %s199, %s201
      %p205 = scmp.eq.s32.totalorder %s20, 0
      %p206 = por %p204, %p205
      %p207 = scmp.ne.s32.totalorder %s199, %s201
      %p208 = scmp.eq.s32.totalorder %s25, 3
      %p209 = por %p207, %p208
      %p210 = scmp.ne.s32.totalorder %s201, %s202
      %p211 = scmp.eq.s32.totalorder %s25, 0
      %p212 = por %p210, %p211
      %p213 = scmp.ne.s32.totalorder %s201, %s202
      %p214 = scmp.eq.s32.totalorder %s26, 3
      %p215 = por %p213, %p214
      %p217 = scmp.ne.s32.totalorder %s202, %s216
      %p218 = scmp.eq.s32.totalorder %s26, 0
      %p219 = por %p217, %p218
      %s221 = sadd.s32 %s220, 1
      %p224 = scmp.eq.s32.totalorder %s20, 3
      %p225 = scmp.ne.s32.totalorder %s220, %s222
      %p226 = scmp.eq.s32.totalorder %s20, 0
      %p227 = por %p225, %p226
      %p228 = scmp.ne.s32.totalorder %s220, %s222
      %p229 = scmp.eq.s32.totalorder %s25, 3
      %p230 = por %p228, %p229
      %p231 = scmp.ne.s32.totalorder %s222, %s223
      %p232 = scmp.eq.s32.totalorder %s25, 0
      %p233 = por %p231, %p232
      %p234 = scmp.ne.s32.totalorder %s222, %s223
      %p235 = scmp.eq.s32.totalorder %s26, 3
      %p236 = por %p234, %p235
      %p238 = scmp.ne.s32.totalorder %s223, %s237
      %p239 = scmp.eq.s32.totalorder %s26, 0
      %p240 = por %p238, %p239
      %s241 = ssub.s32 %s27, %s39
      %s242 = ssub.s32 %s28, %s35
      %s243 = sor.u32 %s241, %s242
      %p244 = scmp.eq.s32.totalorder %s243, 0
      %s246 = sadd.s32 %s245, 1
      %s247 = scalar_select %p244, %s245, %s246
      %p250 = pneg %p244
      %p251 = scmp.eq.s32.totalorder %s20, 3
      %p252 = por %p250, %p251
      %p253 = scmp.ne.s32.totalorder %s245, %s248
      %p254 = scmp.eq.s32.totalorder %s20, 0
      %p255 = por %p253, %p254
      %p256 = scmp.ne.s32.totalorder %s245, %s248
      %p257 = scmp.eq.s32.totalorder %s25, 3
      %p258 = por %p256, %p257
      %p259 = scmp.ne.s32.totalorder %s248, %s249
      %p260 = scmp.eq.s32.totalorder %s25, 0
      %p261 = por %p259, %p260
      %p262 = scmp.ne.s32.totalorder %s248, %s249
      %p263 = scmp.eq.s32.totalorder %s26, 3
      %p264 = por %p262, %p263
      %p266 = scmp.ne.s32.totalorder %s249, %s265
      %p267 = scmp.eq.s32.totalorder %s26, 0
      %p268 = por %p266, %p267
      %p269 = scmp.le.s32.totalorder 1, %s20
      %p270 = scmp.lt.s32.totalorder %s20, 5
      %p271 = pnand %p269, %p270
      %p272 = pneg %p271
      // Predicated region
      $region9: #{tpu_custom_call.1} parent=5 // pred_check
        _
      $region10: #{tpu_custom_call.1} parent=5 // pred_check_branch
        %274 = sbr.rel (%p271) target = $region12
      $region11: #{tpu_custom_call.1} parent=5 // pred_region
        %s275 = ssub.s32 %s20, 1
        // Predicated region
        $region13: #{tpu_custom_call.1} parent=11 // pred_check
          %p276 = pneg %p107
        $region14: #{tpu_custom_call.1} parent=11 // pred_check_branch
          %278 = sbr.rel (%p276) target = $region16
        $region15: #{tpu_custom_call.1} parent=11 // pred_region
          _
        $region16: #{tpu_custom_call.1} parent=11 // pred_fallthru
          _
        // Predicated region
        $region17: #{tpu_custom_call.1} parent=11 // pred_check
          %p279 = pneg %p128
        $region18: #{tpu_custom_call.1} parent=11 // pred_check_branch
          %281 = sbr.rel (%p279) target = $region20
        $region19: #{tpu_custom_call.1} parent=11 // pred_region
          _
        $region20: #{tpu_custom_call.1} parent=11 // pred_fallthru
          _
        // Predicated region
        $region21: #{tpu_custom_call.1} parent=11 // pred_check
          %p282 = pneg %p149
        $region22: #{tpu_custom_call.1} parent=11 // pred_check_branch
          %284 = sbr.rel (%p282) target = $region24
        $region23: #{tpu_custom_call.1} parent=11 // pred_region
          _
        $region24: #{tpu_custom_call.1} parent=11 // pred_fallthru
          _
        // Predicated region
        $region25: #{tpu_custom_call.1} parent=11 // pred_check
          %p285 = pneg %p170
        $region26: #{tpu_custom_call.1} parent=11 // pred_check_branch
          %287 = sbr.rel (%p285) target = $region28
        $region27: #{tpu_custom_call.1} parent=11 // pred_region
          _
        $region28: #{tpu_custom_call.1} parent=11 // pred_fallthru
          _
        // Predicated region
        $region29: #{tpu_custom_call.1} parent=11 // pred_check
          %p288 = pneg %p191
        $region30: #{tpu_custom_call.1} parent=11 // pred_check_branch
          %290 = sbr.rel (%p288) target = $region32
        $region31: #{tpu_custom_call.1} parent=11 // pred_region
          _
        $region32: #{tpu_custom_call.1} parent=11 // pred_fallthru
          _
        // Predicated region
        $region33: #{tpu_custom_call.1} parent=11 // pred_check
          %p291 = pneg %p212
        $region34: #{tpu_custom_call.1} parent=11 // pred_check_branch
          %293 = sbr.rel (%p291) target = $region36
        $region35: #{tpu_custom_call.1} parent=11 // pred_region
          _
        $region36: #{tpu_custom_call.1} parent=11 // pred_fallthru
          _
        // Predicated region
        $region37: #{tpu_custom_call.1} parent=11 // pred_check
          %p294 = pneg %p233
        $region38: #{tpu_custom_call.1} parent=11 // pred_check_branch
          %296 = sbr.rel (%p294) target = $region40
        $region39: #{tpu_custom_call.1} parent=11 // pred_region
          _
        $region40: #{tpu_custom_call.1} parent=11 // pred_fallthru
          _
      $region12: #{tpu_custom_call.1} parent=5 // pred_fallthru
        _
      %p297 = scmp.lt.s32.totalorder %s20, 4
      // Predicated region
      $region41: #{tpu_custom_call.1} parent=5 // pred_check
        %p298 = pneg %p297
      $region42: #{tpu_custom_call.1} parent=5 // pred_check_branch
        %300 = sbr.rel (%p298) target = $region44
      $region43: #{tpu_custom_call.1} parent=5 // pred_region
        // Predicated region
        $region45: #{tpu_custom_call.1} parent=43 // pred_check
          %p301 = pneg %p54
        $region46: #{tpu_custom_call.1} parent=43 // pred_check_branch
          %303 = sbr.rel (%p301) target = $region48
        $region47: #{tpu_custom_call.1} parent=43 // pred_region
          %s304 = smul.u32 4, %s28
          %p305 = scmp.lt.s32.totalorder %s27, 1
          %s306 = scalar_select %p305, %s27, 1
          %p307 = scmp.lt.s32.totalorder %s304, 7
          %s308 = scalar_select %p307, %s304, 7
          %s309 = smul.addr %s306, 8
          %s310 = sadd.s32 %s308, %s309
          %s311 = smul.addr %s310, 4
          %s312 = scalar_lea.vmem %s0, %s311
          %s313 = smul.u32 4, %s28
        $region48: #{tpu_custom_call.1} parent=43 // pred_fallthru
          _
        // Predicated region
        $region49: #{tpu_custom_call.1} parent=43 // pred_check
          %p314 = pneg %p80
        $region50: #{tpu_custom_call.1} parent=43 // pred_check_branch
          %316 = sbr.rel (%p314) target = $region52
        $region51: #{tpu_custom_call.1} parent=43 // pred_region
          %p317 = scmp.lt.s32.totalorder %s27, 1
          %s318 = scalar_select %p317, %s27, 1
          %s319 = smul.addr %s318, 4
          %s320 = smul.addr %s319, 8
          %s321 = scalar_lea.vmem %s1, %s320
        $region52: #{tpu_custom_call.1} parent=43 // pred_fallthru
          _
      $region44: #{tpu_custom_call.1} parent=5 // pred_fallthru
        _
      %p322 = scmp.le.s32.totalorder 1, %s20
      %p323 = scmp.lt.s32.totalorder %s20, 5
      %p324 = pnand %p322, %p323
      %p325 = pneg %p324
      // Predicated region
      $region53: #{tpu_custom_call.1} parent=5 // pred_check
        _
      $region54: #{tpu_custom_call.1} parent=5 // pred_check_branch
        %327 = sbr.rel (%p324) target = $region56
      $region55: #{tpu_custom_call.1} parent=5 // pred_region
        %s328 = ssub.s32 %s20, 1
        %s329 = smul.u32 4, %s30
        %p330 = scmp.lt.s32.totalorder %s29, 1
        %s331 = scalar_select %p330, %s29, 1
        %p332 = scmp.lt.s32.totalorder %s329, 7
        %s333 = scalar_select %p332, %s329, 7
        %s334 = smul.addr %s331, 8
        %s335 = sadd.s32 %s333, %s334
        %s336 = smul.addr %s335, 4
        %s337 = scalar_lea.vmem %s0, %s336
        %p338 = pneg %p60
        %p339 = pneg %p57
        %p340 = scmp.lt.s32.totalorder %s29, 1
        %s341 = scalar_select %p340, %s29, 1
        %s342 = smul.addr %s341, 4
        %s343 = smul.addr %s342, 8
        %s344 = scalar_lea.vmem %s1, %s343
        %p345 = pneg %p86
        %p346 = pneg %p83
        %p347 = pneg %p107
        %p348 = pneg %p104
        %p349 = pneg %p128
        %p350 = pneg %p125
        %p351 = pneg %p149
        %p352 = pneg %p146
        %p353 = pneg %p170
        %p354 = pneg %p167
        %p355 = pneg %p191
        %p356 = pneg %p188
        %p357 = pneg %p212
        %p358 = pneg %p209
        %p359 = pneg %p233
        %p360 = pneg %p230
        %p361 = pneg %p261
        %p362 = pneg %p258
        %s363 = sand.u32 %s248, 1
        %s364 = scalar_lea.sflag [#allocation4], %s363
        %s365 = sand.u32 %s248, 1
        %s366 = smul.addr %s365, 4
        %s367 = scalar_lea.vmem [#allocation3], %s366
        %s368 = smul.u32 4, %s30
        %p369 = scmp.lt.s32.totalorder %s29, 1
        %s370 = scalar_select %p369, %s29, 1
        %p371 = scmp.lt.s32.totalorder %s368, 7
        %s372 = scalar_select %p371, %s368, 7
        %s373 = smul.addr %s370, 8
        %s374 = sadd.s32 %s372, %s373
        %s375 = smul.addr %s374, 4
        %s376 = scalar_lea.vmem %s0, %s375
        %s377 = smul.u32 4, %s30
        %p378 = scmp.lt.s32.totalorder %s29, 1
        %s379 = scalar_select %p378, %s29, 1
        %s380 = smul.addr %s379, 4
        %s381 = smul.addr %s380, 8
        %s382 = scalar_lea.vmem %s1, %s381
        %s383 = smul.u32 4, %s30
        %v384 = vld [vmem:[%s376] sm:$0x77]
        %v385 = vld [vmem:[%s376 + $0x8] sm:$0x77]
        %v386 = vld [vmem:[%s2] sm:$0xff]
        %v387 = vld [vmem:[%s2 + $0x8] sm:$0xff]
        %v388 = vld [vmem:[%s2 + $0x10] sm:$0xff]
        %v389 = vld [vmem:[%s2 + $0x18] sm:$0xff]
        %v390 = vld [vmem:[%s382] sm:$0xff]
        %v391 = vld [vmem:[%s382 + $0x8] sm:$0xff]
        %v392 = vld [vmem:[%s382 + $0x10] sm:$0xff]
        %v393 = vld [vmem:[%s382 + $0x18] sm:$0xff]
        %395 = vset.pattern.permute.xlu0 0
        %396 = vperm.xlu0 %395, %v390
        %v397 = vpop.permute.xlu0 %396
        %400 = vset.pattern.permute.xlu0 0
        %401 = vperm.xlu0 %400, %v391
        %v402 = vpop.permute.xlu0 %401
        %405 = vset.pattern.permute.xlu0 0
        %406 = vperm.xlu0 %405, %v392
        %v407 = vpop.permute.xlu0 %406
        %410 = vset.pattern.permute.xlu0 0
        %411 = vperm.xlu0 %410, %v393
        %v412 = vpop.permute.xlu0 %411
        %v416 = vcombine.high %v384, %v384
        %v417 = vcombine.high %v385, %v385
        %vm418 = vcmask 23552
        %v420 = vsel %vm418, %v386, 0
        %v423 = vsel %vm418, %v387, 0
        %v426 = vsel %vm418, %v388, 0
        %v429 = vsel %vm418, %v389, 0
        %vm431 = vcmask 1042432
        %v432 = vsel %vm431, %v384, 0
        %v434 = vsel %vm431, %v416, 0
        %v436 = vsel %vm431, %v385, 0
        %v438 = vsel %vm431, %v417, 0
        %440 = vmatprep.subr.mxu0 %v434
        %441 = vmatpush1.msra.mxu0 %v432
        %442 = vmatprep.subr.mxu0 0.0
        %443 = vmatpush1.msra.mxu0 0.0
        %444 = vmatprep.subr.mxu0 0.0
        %445 = vmatpush1.msra.mxu0 0.0
        %446 = vmatprep.subr.mxu0 0.0
        %447 = vmatpush1.msra.mxu0 0.0
        %448 = vmatprep.subr.mxu0 0.0
        %449 = vmatpush1.msra.mxu0 0.0
        %450 = vmatprep.subr.mxu0 0.0
        %451 = vmatpush1.msra.mxu0 0.0
        %452 = vmatprep.subr.mxu0 0.0
        %453 = vmatpush1.msra.mxu0 0.0
        %454 = vmatprep.subr.mxu0 0.0
        %455 = vmatpush1.msra.mxu0 0.0
        %456 = vmatprep.subr.mxu0 0.0
        %457 = vmatpush1.msra.mxu0 0.0
        %458 = vmatprep.subr.mxu0 0.0
        %459 = vmatpush1.msra.mxu0 0.0
        %460 = vmatprep.subr.mxu0 0.0
        %461 = vmatpush1.msra.mxu0 0.0
        %462 = vmatprep.subr.mxu0 0.0
        %463 = vmatpush1.msra.mxu0 0.0
        %464 = vmatprep.subr.mxu0 0.0
        %465 = vmatpush1.msra.mxu0 0.0
        %466 = vmatprep.subr.mxu0 0.0
        %467 = vmatpush1.msra.mxu0 0.0
        %468 = vmatprep.subr.mxu0 0.0
        %469 = vmatpush1.msra.mxu0 0.0
        %470 = vmatprep.subr.mxu0 0.0
        %471 = vmatpush1.msra.mxu0 0.0
        %472 = vmatprep.subr.mxu0 0.0
        %473 = vmatpush1.msra.mxu0 0.0
        %474 = vmatprep.subr.mxu0 0.0
        %475 = vmatpush1.msra.mxu0 0.0
        %476 = vmatprep.subr.mxu0 0.0
        %477 = vmatpush1.msra.mxu0 0.0
        %478 = vmatprep.subr.mxu0 0.0
        %479 = vmatpush1.msra.mxu0 0.0
        %480 = vmatprep.subr.mxu0 0.0
        %481 = vmatpush1.msra.mxu0 0.0
        %482 = vmatprep.subr.mxu0 0.0
        %483 = vmatpush1.msra.mxu0 0.0
        %484 = vmatprep.subr.mxu0 0.0
        %485 = vmatpush1.msra.mxu0 0.0
        %486 = vmatprep.subr.mxu0 0.0
        %487 = vmatpush1.msra.mxu0 0.0
        %488 = vmatprep.subr.mxu0 0.0
        %489 = vmatpush1.msra.mxu0 0.0
        %490 = vmatprep.subr.mxu0 0.0
        %491 = vmatpush1.msra.mxu0 0.0
        %492 = vmatprep.subr.mxu0 0.0
        %493 = vmatpush1.msra.mxu0 0.0
        %494 = vmatprep.subr.mxu0 0.0
        %495 = vmatpush1.msra.mxu0 0.0
        %496 = vmatprep.subr.mxu0 0.0
        %497 = vmatpush1.msra.mxu0 0.0
        %498 = vmatprep.subr.mxu0 0.0
        %499 = vmatpush1.msra.mxu0 0.0
        %500 = vmatprep.subr.mxu0 0.0
        %501 = vmatpush1.msra.mxu0 0.0
        %502 = vmatprep.subr.mxu0 0.0
        %503 = vmatpush1.msra.mxu0 0.0
        %504 = vmatprep.mubr.f32.mxu0 0.0
        %505 = vmatmul.mubr.f32.gmra.mrb[0].mxu0 %v420
        %v506 = vpop.f32.mrb[0].mxu0
        %v507 = vadd.f32 %v397, %v506
        %v508 = vpop.f32.mrb[0].mxu0
        %v509 = vadd.f32 %v397, %v508
        %510 = vmatprep.mubr.f32.mxu0 0.0
        %511 = vmatmul.mubr.f32.gmra.mrb[0].mxu0 %v423
        %v512 = vpop.f32.mrb[0].mxu0
        %v513 = vadd.f32 %v402, %v512
        %v514 = vpop.f32.mrb[0].mxu0
        %v515 = vadd.f32 %v402, %v514
        %516 = vmatprep.mubr.f32.mxu0 0.0
        %517 = vmatmul.mubr.f32.gmra.mrb[0].mxu0 %v426
        %v518 = vpop.f32.mrb[0].mxu0
        %v519 = vadd.f32 %v407, %v518
        %v520 = vpop.f32.mrb[0].mxu0
        %v521 = vadd.f32 %v407, %v520
        %522 = vmatprep.mubr.f32.mxu0 0.0
        %523 = vmatmul.mubr.f32.gmra.mrb[0].mxu0 %v429
        %v524 = vpop.f32.mrb[0].mxu0
        %v525 = vadd.f32 %v412, %v524
        %v526 = vpop.f32.mrb[0].mxu0
        %v527 = vadd.f32 %v412, %v526
        %528 = vdwg.mxu0
        %529 = vmatprep.subr.mxu0 %v438
        %530 = vmatpush1.msra.mxu0 %v436
        %531 = vmatprep.subr.mxu0 0.0
        %532 = vmatpush1.msra.mxu0 0.0
        %533 = vmatprep.subr.mxu0 0.0
        %534 = vmatpush1.msra.mxu0 0.0
        %535 = vmatprep.subr.mxu0 0.0
        %536 = vmatpush1.msra.mxu0 0.0
        %537 = vmatprep.subr.mxu0 0.0
        %538 = vmatpush1.msra.mxu0 0.0
        %539 = vmatprep.subr.mxu0 0.0
        %540 = vmatpush1.msra.mxu0 0.0
        %541 = vmatprep.subr.mxu0 0.0
        %542 = vmatpush1.msra.mxu0 0.0
        %543 = vmatprep.subr.mxu0 0.0
        %544 = vmatpush1.msra.mxu0 0.0
        %545 = vmatprep.subr.mxu0 0.0
        %546 = vmatpush1.msra.mxu0 0.0
        %547 = vmatprep.subr.mxu0 0.0
        %548 = vmatpush1.msra.mxu0 0.0
        %549 = vmatprep.subr.mxu0 0.0
        %550 = vmatpush1.msra.mxu0 0.0
        %551 = vmatprep.subr.mxu0 0.0
        %552 = vmatpush1.msra.mxu0 0.0
        %553 = vmatprep.subr.mxu0 0.0
        %554 = vmatpush1.msra.mxu0 0.0
        %555 = vmatprep.subr.mxu0 0.0
        %556 = vmatpush1.msra.mxu0 0.0
        %557 = vmatprep.subr.mxu0 0.0
        %558 = vmatpush1.msra.mxu0 0.0
        %559 = vmatprep.subr.mxu0 0.0
        %560 = vmatpush1.msra.mxu0 0.0
        %561 = vmatprep.subr.mxu0 0.0
        %562 = vmatpush1.msra.mxu0 0.0
        %563 = vmatprep.subr.mxu0 0.0
        %564 = vmatpush1.msra.mxu0 0.0
        %565 = vmatprep.subr.mxu0 0.0
        %566 = vmatpush1.msra.mxu0 0.0
        %567 = vmatprep.subr.mxu0 0.0
        %568 = vmatpush1.msra.mxu0 0.0
        %569 = vmatprep.subr.mxu0 0.0
        %570 = vmatpush1.msra.mxu0 0.0
        %571 = vmatprep.subr.mxu0 0.0
        %572 = vmatpush1.msra.mxu0 0.0
        %573 = vmatprep.subr.mxu0 0.0
        %574 = vmatpush1.msra.mxu0 0.0
        %575 = vmatprep.subr.mxu0 0.0
        %576 = vmatpush1.msra.mxu0 0.0
        %577 = vmatprep.subr.mxu0 0.0
        %578 = vmatpush1.msra.mxu0 0.0
        %579 = vmatprep.subr.mxu0 0.0
        %580 = vmatpush1.msra.mxu0 0.0
        %581 = vmatprep.subr.mxu0 0.0
        %582 = vmatpush1.msra.mxu0 0.0
        %583 = vmatprep.subr.mxu0 0.0
        %584 = vmatpush1.msra.mxu0 0.0
        %585 = vmatprep.subr.mxu0 0.0
        %586 = vmatpush1.msra.mxu0 0.0
        %587 = vmatprep.subr.mxu0 0.0
        %588 = vmatpush1.msra.mxu0 0.0
        %589 = vmatprep.subr.mxu0 0.0
        %590 = vmatpush1.msra.mxu0 0.0
        %591 = vmatprep.subr.mxu0 0.0
        %592 = vmatpush1.msra.mxu0 0.0
        %593 = vmatprep.mubr.f32.mxu0 0.0
        %594 = vmatmul.mubr.f32.gmra.mrb[0].mxu0 %v420
        %v595 = vpop.f32.mrb[0].mxu0
        %v596 = vadd.f32 %v397, %v595
        %v597 = vpop.f32.mrb[0].mxu0
        %v598 = vadd.f32 %v397, %v597
        %599 = vmatprep.mubr.f32.mxu0 0.0
        %600 = vmatmul.mubr.f32.gmra.mrb[0].mxu0 %v423
        %v601 = vpop.f32.mrb[0].mxu0
        %v602 = vadd.f32 %v402, %v601
        %v603 = vpop.f32.mrb[0].mxu0
        %v604 = vadd.f32 %v402, %v603
        %605 = vmatprep.mubr.f32.mxu0 0.0
        %606 = vmatmul.mubr.f32.gmra.mrb[0].mxu0 %v426
        %v607 = vpop.f32.mrb[0].mxu0
        %v608 = vadd.f32 %v407, %v607
        %v609 = vpop.f32.mrb[0].mxu0
        %v610 = vadd.f32 %v407, %v609
        %611 = vmatprep.mubr.f32.mxu0 0.0
        %612 = vmatmul.mubr.f32.gmra.mrb[0].mxu0 %v429
        %v613 = vpop.f32.mrb[0].mxu0
        %v614 = vadd.f32 %v412, %v613
        %v615 = vpop.f32.mrb[0].mxu0
        %v616 = vadd.f32 %v412, %v615
        %617 = vdwg.mxu0
        %vm618 = vcmp.gt.f32.partialorder %v507, 0.0
        %vm619 = vcmp.gt.f32.partialorder %v509, 0.0
        %vm620 = vcmp.gt.f32.partialorder %v596, 0.0
        %vm621 = vcmp.gt.f32.partialorder %v598, 0.0
        %vm622 = vcmp.gt.f32.partialorder %v513, 0.0
        %vm623 = vcmp.gt.f32.partialorder %v515, 0.0
        %vm624 = vcmp.gt.f32.partialorder %v602, 0.0
        %vm625 = vcmp.gt.f32.partialorder %v604, 0.0
        %vm626 = vcmp.gt.f32.partialorder %v519, 0.0
        %vm627 = vcmp.gt.f32.partialorder %v521, 0.0
        %vm628 = vcmp.gt.f32.partialorder %v608, 0.0
        %vm629 = vcmp.gt.f32.partialorder %v610, 0.0
        %vm630 = vcmp.gt.f32.partialorder %v525, 0.0
        %vm631 = vcmp.gt.f32.partialorder %v527, 0.0
        %vm632 = vcmp.gt.f32.partialorder %v614, 0.0
        %vm633 = vcmp.gt.f32.partialorder %v616, 0.0
        %v634 = vmul.f32 %v507, 0.2
        %v635 = vmul.f32 %v509, 0.2
        %v636 = vmul.f32 %v596, 0.2
        %v637 = vmul.f32 %v598, 0.2
        %v638 = vmul.f32 %v513, 0.2
        %v639 = vmul.f32 %v515, 0.2
        %v640 = vmul.f32 %v602, 0.2
        %v641 = vmul.f32 %v604, 0.2
        %v642 = vmul.f32 %v519, 0.2
        %v643 = vmul.f32 %v521, 0.2
        %v644 = vmul.f32 %v608, 0.2
        %v645 = vmul.f32 %v610, 0.2
        %v646 = vmul.f32 %v525, 0.2
        %v647 = vmul.f32 %v527, 0.2
        %v648 = vmul.f32 %v614, 0.2
        %v649 = vmul.f32 %v616, 0.2
        %v650 = vsel %vm618, %v507, %v634
        %v651 = vsel %vm619, %v509, %v635
        %v652 = vsel %vm620, %v596, %v636
        %v653 = vsel %vm621, %v598, %v637
        %v654 = vsel %vm622, %v513, %v638
        %v655 = vsel %vm623, %v515, %v639
        %v656 = vsel %vm624, %v602, %v640
        %v657 = vsel %vm625, %v604, %v641
        %v658 = vsel %vm626, %v519, %v642
        %v659 = vsel %vm627, %v521, %v643
        %v660 = vsel %vm628, %v608, %v644
        %v661 = vsel %vm629, %v610, %v645
        %v662 = vsel %vm630, %v525, %v646
        %v663 = vsel %vm631, %v527, %v647
        %v664 = vsel %vm632, %v614, %v648
        %v665 = vsel %vm633, %v616, %v649
        %v666 = vld [vmem:[%s3] sm:$0xff]
        %v667 = vld [vmem:[%s3 + $0x8] sm:$0xff]
        %v668 = vld [vmem:[%s3 + $0x10] sm:$0xff]
        %v669 = vld [vmem:[%s3 + $0x18] sm:$0xff]
        %v670 = vld [vmem:[%s4] sm:$0xff]
        %v671 = vld [vmem:[%s4 + $0x8] sm:$0xff]
        %v672 = vld [vmem:[%s4 + $0x10] sm:$0xff]
        %v673 = vld [vmem:[%s4 + $0x18] sm:$0xff]
        %675 = vset.pattern.permute.xlu0 0
        %676 = vperm.xlu0 %675, %v670
        %v677 = vpop.permute.xlu0 %676
        %680 = vset.pattern.permute.xlu0 0
        %681 = vperm.xlu0 %680, %v671
        %v682 = vpop.permute.xlu0 %681
        %685 = vset.pattern.permute.xlu0 0
        %686 = vperm.xlu0 %685, %v672
        %v687 = vpop.permute.xlu0 %686
        %690 = vset.pattern.permute.xlu0 0
        %691 = vperm.xlu0 %690, %v673
        %v692 = vpop.permute.xlu0 %691
        %vm694 = vcmask 261120
        %v696 = vsel %vm694, %v666, 0
        %v699 = vsel %vm694, %v667, 0
        %v702 = vsel %vm694, %v668, 0
        %v705 = vsel %vm694, %v669, 0
        %707 = vmatprep.subr.mxu0 %v651
        %708 = vmatpush1.msra.mxu0 %v650
        %709 = vmatprep.subr.mxu0 %v655
        %710 = vmatpush1.msra.mxu0 %v654
        %711 = vmatprep.subr.mxu0 %v659
        %712 = vmatpush1.msra.mxu0 %v658
        %713 = vmatprep.subr.mxu0 %v663
        %714 = vmatpush1.msra.mxu0 %v662
        %715 = vmatprep.subr.mxu0 0.0
        %716 = vmatpush1.msra.mxu0 0.0
        %717 = vmatprep.subr.mxu0 0.0
        %718 = vmatpush1.msra.mxu0 0.0
        %719 = vmatprep.subr.mxu0 0.0
        %720 = vmatpush1.msra.mxu0 0.0
        %721 = vmatprep.subr.mxu0 0.0
        %722 = vmatpush1.msra.mxu0 0.0
        %723 = vmatprep.subr.mxu0 0.0
        %724 = vmatpush1.msra.mxu0 0.0
        %725 = vmatprep.subr.mxu0 0.0
        %726 = vmatpush1.msra.mxu0 0.0
        %727 = vmatprep.subr.mxu0 0.0
        %728 = vmatpush1.msra.mxu0 0.0
        %729 = vmatprep.subr.mxu0 0.0
        %730 = vmatpush1.msra.mxu0 0.0
        %731 = vmatprep.subr.mxu0 0.0
        %732 = vmatpush1.msra.mxu0 0.0
        %733 = vmatprep.subr.mxu0 0.0
        %734 = vmatpush1.msra.mxu0 0.0
        %735 = vmatprep.subr.mxu0 0.0
        %736 = vmatpush1.msra.mxu0 0.0
        %737 = vmatprep.subr.mxu0 0.0
        %738 = vmatpush1.msra.mxu0 0.0
        %739 = vmatprep.subr.mxu0 0.0
        %740 = vmatpush1.msra.mxu0 0.0
        %741 = vmatprep.subr.mxu0 0.0
        %742 = vmatpush1.msra.mxu0 0.0
        %743 = vmatprep.subr.mxu0 0.0
        %744 = vmatpush1.msra.mxu0 0.0
        %745 = vmatprep.subr.mxu0 0.0
        %746 = vmatpush1.msra.mxu0 0.0
        %747 = vmatprep.subr.mxu0 0.0
        %748 = vmatpush1.msra.mxu0 0.0
        %749 = vmatprep.subr.mxu0 0.0
        %750 = vmatpush1.msra.mxu0 0.0
        %751 = vmatprep.subr.mxu0 0.0
        %752 = vmatpush1.msra.mxu0 0.0
        %753 = vmatprep.subr.mxu0 0.0
        %754 = vmatpush1.msra.mxu0 0.0
        %755 = vmatprep.subr.mxu0 0.0
        %756 = vmatpush1.msra.mxu0 0.0
        %757 = vmatprep.subr.mxu0 0.0
        %758 = vmatpush1.msra.mxu0 0.0
        %759 = vmatprep.subr.mxu0 0.0
        %760 = vmatpush1.msra.mxu0 0.0
        %761 = vmatprep.subr.mxu0 0.0
        %762 = vmatpush1.msra.mxu0 0.0
        %763 = vmatprep.subr.mxu0 0.0
        %764 = vmatpush1.msra.mxu0 0.0
        %765 = vmatprep.subr.mxu0 0.0
        %766 = vmatpush1.msra.mxu0 0.0
        %767 = vmatprep.subr.mxu0 0.0
        %768 = vmatpush1.msra.mxu0 0.0
        %769 = vmatprep.subr.mxu0 0.0
        %770 = vmatpush1.msra.mxu0 0.0
        %771 = vmatprep.mubr.f32.mxu0 0.0
        %772 = vmatmul.mubr.f32.gmra.mrb[0].mxu0 %v696
        %v773 = vpop.f32.mrb[0].mxu0
        %v774 = vadd.f32 %v677, %v773
        %v775 = vpop.f32.mrb[0].mxu0
        %v776 = vadd.f32 %v677, %v775
        %777 = vmatprep.mubr.f32.mxu0 0.0
        %778 = vmatmul.mubr.f32.gmra.mrb[0].mxu0 %v699
        %v779 = vpop.f32.mrb[0].mxu0
        %v780 = vadd.f32 %v682, %v779
        %v781 = vpop.f32.mrb[0].mxu0
        %v782 = vadd.f32 %v682, %v781
        %783 = vmatprep.mubr.f32.mxu0 0.0
        %784 = vmatmul.mubr.f32.gmra.mrb[0].mxu0 %v702
        %v785 = vpop.f32.mrb[0].mxu0
        %v786 = vadd.f32 %v687, %v785
        %v787 = vpop.f32.mrb[0].mxu0
        %v788 = vadd.f32 %v687, %v787
        %789 = vmatprep.mubr.f32.mxu0 0.0
        %790 = vmatmul.mubr.f32.gmra.mrb[0].mxu0 %v705
        %v791 = vpop.f32.mrb[0].mxu0
        %v792 = vadd.f32 %v692, %v791
        %v793 = vpop.f32.mrb[0].mxu0
        %v794 = vadd.f32 %v692, %v793
        %795 = vdwg.mxu0
        %796 = vmatprep.subr.mxu0 %v653
        %797 = vmatpush1.msra.mxu0 %v652
        %798 = vmatprep.subr.mxu0 %v657
        %799 = vmatpush1.msra.mxu0 %v656
        %800 = vmatprep.subr.mxu0 %v661
        %801 = vmatpush1.msra.mxu0 %v660
        %802 = vmatprep.subr.mxu0 %v665
        %803 = vmatpush1.msra.mxu0 %v664
        %804 = vmatprep.subr.mxu0 0.0
        %805 = vmatpush1.msra.mxu0 0.0
        %806 = vmatprep.subr.mxu0 0.0
        %807 = vmatpush1.msra.mxu0 0.0
        %808 = vmatprep.subr.mxu0 0.0
        %809 = vmatpush1.msra.mxu0 0.0
        %810 = vmatprep.subr.mxu0 0.0
        %811 = vmatpush1.msra.mxu0 0.0
        %812 = vmatprep.subr.mxu0 0.0
        %813 = vmatpush1.msra.mxu0 0.0
        %814 = vmatprep.subr.mxu0 0.0
        %815 = vmatpush1.msra.mxu0 0.0
        %816 = vmatprep.subr.mxu0 0.0
        %817 = vmatpush1.msra.mxu0 0.0
        %818 = vmatprep.subr.mxu0 0.0
        %819 = vmatpush1.msra.mxu0 0.0
        %820 = vmatprep.subr.mxu0 0.0
        %821 = vmatpush1.msra.mxu0 0.0
        %822 = vmatprep.subr.mxu0 0.0
        %823 = vmatpush1.msra.mxu0 0.0
        %824 = vmatprep.subr.mxu0 0.0
        %825 = vmatpush1.msra.mxu0 0.0
        %826 = vmatprep.subr.mxu0 0.0
        %827 = vmatpush1.msra.mxu0 0.0
        %828 = vmatprep.subr.mxu0 0.0
        %829 = vmatpush1.msra.mxu0 0.0
        %830 = vmatprep.subr.mxu0 0.0
        %831 = vmatpush1.msra.mxu0 0.0
        %832 = vmatprep.subr.mxu0 0.0
        %833 = vmatpush1.msra.mxu0 0.0
        %834 = vmatprep.subr.mxu0 0.0
        %835 = vmatpush1.msra.mxu0 0.0
        %836 = vmatprep.subr.mxu0 0.0
        %837 = vmatpush1.msra.mxu0 0.0
        %838 = vmatprep.subr.mxu0 0.0
        %839 = vmatpush1.msra.mxu0 0.0
        %840 = vmatprep.subr.mxu0 0.0
        %841 = vmatpush1.msra.mxu0 0.0
        %842 = vmatprep.subr.mxu0 0.0
        %843 = vmatpush1.msra.mxu0 0.0
        %844 = vmatprep.subr.mxu0 0.0
        %845 = vmatpush1.msra.mxu0 0.0
        %846 = vmatprep.subr.mxu0 0.0
        %847 = vmatpush1.msra.mxu0 0.0
        %848 = vmatprep.subr.mxu0 0.0
        %849 = vmatpush1.msra.mxu0 0.0
        %850 = vmatprep.subr.mxu0 0.0
        %851 = vmatpush1.msra.mxu0 0.0
        %852 = vmatprep.subr.mxu0 0.0
        %853 = vmatpush1.msra.mxu0 0.0
        %854 = vmatprep.subr.mxu0 0.0
        %855 = vmatpush1.msra.mxu0 0.0
        %856 = vmatprep.subr.mxu0 0.0
        %857 = vmatpush1.msra.mxu0 0.0
        %858 = vmatprep.subr.mxu0 0.0
        %859 = vmatpush1.msra.mxu0 0.0
        %860 = vmatprep.mubr.f32.mxu0 0.0
        %861 = vmatmul.mubr.f32.gmra.mrb[0].mxu0 %v696
        %v862 = vpop.f32.mrb[0].mxu0
        %v863 = vadd.f32 %v677, %v862
        %v864 = vpop.f32.mrb[0].mxu0
        %v865 = vadd.f32 %v677, %v864
        %866 = vmatprep.mubr.f32.mxu0 0.0
        %867 = vmatmul.mubr.f32.gmra.mrb[0].mxu0 %v699
        %v868 = vpop.f32.mrb[0].mxu0
        %v869 = vadd.f32 %v682, %v868
        %v870 = vpop.f32.mrb[0].mxu0
        %v871 = vadd.f32 %v682, %v870
        %872 = vmatprep.mubr.f32.mxu0 0.0
        %873 = vmatmul.mubr.f32.gmra.mrb[0].mxu0 %v702
        %v874 = vpop.f32.mrb[0].mxu0
        %v875 = vadd.f32 %v687, %v874
        %v876 = vpop.f32.mrb[0].mxu0
        %v877 = vadd.f32 %v687, %v876
        %878 = vmatprep.mubr.f32.mxu0 0.0
        %879 = vmatmul.mubr.f32.gmra.mrb[0].mxu0 %v705
        %v880 = vpop.f32.mrb[0].mxu0
        %v881 = vadd.f32 %v692, %v880
        %v882 = vpop.f32.mrb[0].mxu0
        %v883 = vadd.f32 %v692, %v882
        %884 = vdwg.mxu0
        %vm885 = vcmp.gt.f32.partialorder %v774, 0.0
        %vm886 = vcmp.gt.f32.partialorder %v776, 0.0
        %vm887 = vcmp.gt.f32.partialorder %v863, 0.0
        %vm888 = vcmp.gt.f32.partialorder %v865, 0.0
        %vm889 = vcmp.gt.f32.partialorder %v780, 0.0
        %vm890 = vcmp.gt.f32.partialorder %v782, 0.0
        %vm891 = vcmp.gt.f32.partialorder %v869, 0.0
        %vm892 = vcmp.gt.f32.partialorder %v871, 0.0
        %vm893 = vcmp.gt.f32.partialorder %v786, 0.0
        %vm894 = vcmp.gt.f32.partialorder %v788, 0.0
        %vm895 = vcmp.gt.f32.partialorder %v875, 0.0
        %vm896 = vcmp.gt.f32.partialorder %v877, 0.0
        %vm897 = vcmp.gt.f32.partialorder %v792, 0.0
        %vm898 = vcmp.gt.f32.partialorder %v794, 0.0
        %vm899 = vcmp.gt.f32.partialorder %v881, 0.0
        %vm900 = vcmp.gt.f32.partialorder %v883, 0.0
        %v901 = vmul.f32 %v774, 0.2
        %v902 = vmul.f32 %v776, 0.2
        %v903 = vmul.f32 %v863, 0.2
        %v904 = vmul.f32 %v865, 0.2
        %v905 = vmul.f32 %v780, 0.2
        %v906 = vmul.f32 %v782, 0.2
        %v907 = vmul.f32 %v869, 0.2
        %v908 = vmul.f32 %v871, 0.2
        %v909 = vmul.f32 %v786, 0.2
        %v910 = vmul.f32 %v788, 0.2
        %v911 = vmul.f32 %v875, 0.2
        %v912 = vmul.f32 %v877, 0.2
        %v913 = vmul.f32 %v792, 0.2
        %v914 = vmul.f32 %v794, 0.2
        %v915 = vmul.f32 %v881, 0.2
        %v916 = vmul.f32 %v883, 0.2
        %v917 = vsel %vm885, %v774, %v901
        %v918 = vsel %vm886, %v776, %v902
        %v919 = vsel %vm887, %v863, %v903
        %v920 = vsel %vm888, %v865, %v904
        %v921 = vsel %vm889, %v780, %v905
        %v922 = vsel %vm890, %v782, %v906
        %v923 = vsel %vm891, %v869, %v907
        %v924 = vsel %vm892, %v871, %v908
        %v925 = vsel %vm893, %v786, %v909
        %v926 = vsel %vm894, %v788, %v910
        %v927 = vsel %vm895, %v875, %v911
        %v928 = vsel %vm896, %v877, %v912
        %v929 = vsel %vm897, %v792, %v913
        %v930 = vsel %vm898, %v794, %v914
        %v931 = vsel %vm899, %v881, %v915
        %v932 = vsel %vm900, %v883, %v916
        %s933 = scalar_lea.vmem %s3, 32
        %v934 = vld [vmem:[%s933] sm:$0xff]
        %v935 = vld [vmem:[%s933 + $0x8] sm:$0xff]
        %v936 = vld [vmem:[%s933 + $0x10] sm:$0xff]
        %v937 = vld [vmem:[%s933 + $0x18] sm:$0xff]
        %s938 = scalar_lea.vmem %s4, 32
        %v939 = vld [vmem:[%s938] sm:$0xff]
        %v940 = vld [vmem:[%s938 + $0x8] sm:$0xff]
        %v941 = vld [vmem:[%s938 + $0x10] sm:$0xff]
        %v942 = vld [vmem:[%s938 + $0x18] sm:$0xff]
        %944 = vset.pattern.permute.xlu0 0
        %945 = vperm.xlu0 %944, %v939
        %v946 = vpop.permute.xlu0 %945
        %949 = vset.pattern.permute.xlu0 0
        %950 = vperm.xlu0 %949, %v940
        %v951 = vpop.permute.xlu0 %950
        %954 = vset.pattern.permute.xlu0 0
        %955 = vperm.xlu0 %954, %v941
        %v956 = vpop.permute.xlu0 %955
        %959 = vset.pattern.permute.xlu0 0
        %960 = vperm.xlu0 %959, %v942
        %v961 = vpop.permute.xlu0 %960
        %v964 = vsel %vm694, %v934, 0
        %v967 = vsel %vm694, %v935, 0
        %v970 = vsel %vm694, %v936, 0
        %v973 = vsel %vm694, %v937, 0
        %975 = vmatprep.subr.mxu0 %v918
        %976 = vmatpush1.msra.mxu0 %v917
        %977 = vmatprep.subr.mxu0 %v922
        %978 = vmatpush1.msra.mxu0 %v921
        %979 = vmatprep.subr.mxu0 %v926
        %980 = vmatpush1.msra.mxu0 %v925
        %981 = vmatprep.subr.mxu0 %v930
        %982 = vmatpush1.msra.mxu0 %v929
        %983 = vmatprep.subr.mxu0 0.0
        %984 = vmatpush1.msra.mxu0 0.0
        %985 = vmatprep.subr.mxu0 0.0
        %986 = vmatpush1.msra.mxu0 0.0
        %987 = vmatprep.subr.mxu0 0.0
        %988 = vmatpush1.msra.mxu0 0.0
        %989 = vmatprep.subr.mxu0 0.0
        %990 = vmatpush1.msra.mxu0 0.0
        %991 = vmatprep.subr.mxu0 0.0
        %992 = vmatpush1.msra.mxu0 0.0
        %993 = vmatprep.subr.mxu0 0.0
        %994 = vmatpush1.msra.mxu0 0.0
        %995 = vmatprep.subr.mxu0 0.0
        %996 = vmatpush1.msra.mxu0 0.0
        %997 = vmatprep.subr.mxu0 0.0
        %998 = vmatpush1.msra.mxu0 0.0
        %999 = vmatprep.subr.mxu0 0.0
        %1000 = vmatpush1.msra.mxu0 0.0
        %1001 = vmatprep.subr.mxu0 0.0
        %1002 = vmatpush1.msra.mxu0 0.0
        %1003 = vmatprep.subr.mxu0 0.0
        %1004 = vmatpush1.msra.mxu0 0.0
        %1005 = vmatprep.subr.mxu0 0.0
        %1006 = vmatpush1.msra.mxu0 0.0
        %1007 = vmatprep.subr.mxu0 0.0
        %1008 = vmatpush1.msra.mxu0 0.0
        %1009 = vmatprep.subr.mxu0 0.0
        %1010 = vmatpush1.msra.mxu0 0.0
        %1011 = vmatprep.subr.mxu0 0.0
        %1012 = vmatpush1.msra.mxu0 0.0
        %1013 = vmatprep.subr.mxu0 0.0
        %1014 = vmatpush1.msra.mxu0 0.0
        %1015 = vmatprep.subr.mxu0 0.0
        %1016 = vmatpush1.msra.mxu0 0.0
        %1017 = vmatprep.subr.mxu0 0.0
        %1018 = vmatpush1.msra.mxu0 0.0
        %1019 = vmatprep.subr.mxu0 0.0
        %1020 = vmatpush1.msra.mxu0 0.0
        %1021 = vmatprep.subr.mxu0 0.0
        %1022 = vmatpush1.msra.mxu0 0.0
        %1023 = vmatprep.subr.mxu0 0.0
        %1024 = vmatpush1.msra.mxu0 0.0
        %1025 = vmatprep.subr.mxu0 0.0
        %1026 = vmatpush1.msra.mxu0 0.0
        %1027 = vmatprep.subr.mxu0 0.0
        %1028 = vmatpush1.msra.mxu0 0.0
        %1029 = vmatprep.subr.mxu0 0.0
        %1030 = vmatpush1.msra.mxu0 0.0
        %1031 = vmatprep.subr.mxu0 0.0
        %1032 = vmatpush1.msra.mxu0 0.0
        %1033 = vmatprep.subr.mxu0 0.0
        %1034 = vmatpush1.msra.mxu0 0.0
        %1035 = vmatprep.subr.mxu0 0.0
        %1036 = vmatpush1.msra.mxu0 0.0
        %1037 = vmatprep.subr.mxu0 0.0
        %1038 = vmatpush1.msra.mxu0 0.0
        %1039 = vmatprep.mubr.f32.mxu0 0.0
        %1040 = vmatmul.mubr.f32.gmra.mrb[0].mxu0 %v964
        %v1041 = vpop.f32.mrb[0].mxu0
        %v1042 = vadd.f32 %v946, %v1041
        %v1043 = vpop.f32.mrb[0].mxu0
        %v1044 = vadd.f32 %v946, %v1043
        %1045 = vmatprep.mubr.f32.mxu0 0.0
        %1046 = vmatmul.mubr.f32.gmra.mrb[0].mxu0 %v967
        %v1047 = vpop.f32.mrb[0].mxu0
        %v1048 = vadd.f32 %v951, %v1047
        %v1049 = vpop.f32.mrb[0].mxu0
        %v1050 = vadd.f32 %v951, %v1049
        %1051 = vmatprep.mubr.f32.mxu0 0.0
        %1052 = vmatmul.mubr.f32.gmra.mrb[0].mxu0 %v970
        %v1053 = vpop.f32.mrb[0].mxu0
        %v1054 = vadd.f32 %v956, %v1053
        %v1055 = vpop.f32.mrb[0].mxu0
        %v1056 = vadd.f32 %v956, %v1055
        %1057 = vmatprep.mubr.f32.mxu0 0.0
        %1058 = vmatmul.mubr.f32.gmra.mrb[0].mxu0 %v973
        %v1059 = vpop.f32.mrb[0].mxu0
        %v1060 = vadd.f32 %v961, %v1059
        %v1061 = vpop.f32.mrb[0].mxu0
        %v1062 = vadd.f32 %v961, %v1061
        %1063 = vdwg.mxu0
        %1064 = vmatprep.subr.mxu0 %v920
        %1065 = vmatpush1.msra.mxu0 %v919
        %1066 = vmatprep.subr.mxu0 %v924
        %1067 = vmatpush1.msra.mxu0 %v923
        %1068 = vmatprep.subr.mxu0 %v928
        %1069 = vmatpush1.msra.mxu0 %v927
        %1070 = vmatprep.subr.mxu0 %v932
        %1071 = vmatpush1.msra.mxu0 %v931
        %1072 = vmatprep.subr.mxu0 0.0
        %1073 = vmatpush1.msra.mxu0 0.0
        %1074 = vmatprep.subr.mxu0 0.0
        %1075 = vmatpush1.msra.mxu0 0.0
        %1076 = vmatprep.subr.mxu0 0.0
        %1077 = vmatpush1.msra.mxu0 0.0
        %1078 = vmatprep.subr.mxu0 0.0
        %1079 = vmatpush1.msra.mxu0 0.0
        %1080 = vmatprep.subr.mxu0 0.0
        %1081 = vmatpush1.msra.mxu0 0.0
        %1082 = vmatprep.subr.mxu0 0.0
        %1083 = vmatpush1.msra.mxu0 0.0
        %1084 = vmatprep.subr.mxu0 0.0
        %1085 = vmatpush1.msra.mxu0 0.0
        %1086 = vmatprep.subr.mxu0 0.0
        %1087 = vmatpush1.msra.mxu0 0.0
        %1088 = vmatprep.subr.mxu0 0.0
        %1089 = vmatpush1.msra.mxu0 0.0
        %1090 = vmatprep.subr.mxu0 0.0
        %1091 = vmatpush1.msra.mxu0 0.0
        %1092 = vmatprep.subr.mxu0 0.0
        %1093 = vmatpush1.msra.mxu0 0.0
        %1094 = vmatprep.subr.mxu0 0.0
        %1095 = vmatpush1.msra.mxu0 0.0
        %1096 = vmatprep.subr.mxu0 0.0
        %1097 = vmatpush1.msra.mxu0 0.0
        %1098 = vmatprep.subr.mxu0 0.0
        %1099 = vmatpush1.msra.mxu0 0.0
        %1100 = vmatprep.subr.mxu0 0.0
        %1101 = vmatpush1.msra.mxu0 0.0
        %1102 = vmatprep.subr.mxu0 0.0
        %1103 = vmatpush1.msra.mxu0 0.0
        %1104 = vmatprep.subr.mxu0 0.0
        %1105 = vmatpush1.msra.mxu0 0.0
        %1106 = vmatprep.subr.mxu0 0.0
        %1107 = vmatpush1.msra.mxu0 0.0
        %1108 = vmatprep.subr.mxu0 0.0
        %1109 = vmatpush1.msra.mxu0 0.0
        %1110 = vmatprep.subr.mxu0 0.0
        %1111 = vmatpush1.msra.mxu0 0.0
        %1112 = vmatprep.subr.mxu0 0.0
        %1113 = vmatpush1.msra.mxu0 0.0
        %1114 = vmatprep.subr.mxu0 0.0
        %1115 = vmatpush1.msra.mxu0 0.0
        %1116 = vmatprep.subr.mxu0 0.0
        %1117 = vmatpush1.msra.mxu0 0.0
        %1118 = vmatprep.subr.mxu0 0.0
        %1119 = vmatpush1.msra.mxu0 0.0
        %1120 = vmatprep.subr.mxu0 0.0
        %1121 = vmatpush1.msra.mxu0 0.0
        %1122 = vmatprep.subr.mxu0 0.0
        %1123 = vmatpush1.msra.mxu0 0.0
        %1124 = vmatprep.subr.mxu0 0.0
        %1125 = vmatpush1.msra.mxu0 0.0
        %1126 = vmatprep.subr.mxu0 0.0
        %1127 = vmatpush1.msra.mxu0 0.0
        %1128 = vmatprep.mubr.f32.mxu0 0.0
        %1129 = vmatmul.mubr.f32.gmra.mrb[0].mxu0 %v964
        %v1130 = vpop.f32.mrb[0].mxu0
        %v1131 = vadd.f32 %v946, %v1130
        %v1132 = vpop.f32.mrb[0].mxu0
        %v1133 = vadd.f32 %v946, %v1132
        %1134 = vmatprep.mubr.f32.mxu0 0.0
        %1135 = vmatmul.mubr.f32.gmra.mrb[0].mxu0 %v967
        %v1136 = vpop.f32.mrb[0].mxu0
        %v1137 = vadd.f32 %v951, %v1136
        %v1138 = vpop.f32.mrb[0].mxu0
        %v1139 = vadd.f32 %v951, %v1138
        %1140 = vmatprep.mubr.f32.mxu0 0.0
        %1141 = vmatmul.mubr.f32.gmra.mrb[0].mxu0 %v970
        %v1142 = vpop.f32.mrb[0].mxu0
        %v1143 = vadd.f32 %v956, %v1142
        %v1144 = vpop.f32.mrb[0].mxu0
        %v1145 = vadd.f32 %v956, %v1144
        %1146 = vmatprep.mubr.f32.mxu0 0.0
        %1147 = vmatmul.mubr.f32.gmra.mrb[0].mxu0 %v973
        %v1148 = vpop.f32.mrb[0].mxu0
        %v1149 = vadd.f32 %v961, %v1148
        %v1150 = vpop.f32.mrb[0].mxu0
        %v1151 = vadd.f32 %v961, %v1150
        %1152 = vdwg.mxu0
        %vm1153 = vcmp.gt.f32.partialorder %v1042, 0.0
        %vm1154 = vcmp.gt.f32.partialorder %v1044, 0.0
        %vm1155 = vcmp.gt.f32.partialorder %v1131, 0.0
        %vm1156 = vcmp.gt.f32.partialorder %v1133, 0.0
        %vm1157 = vcmp.gt.f32.partialorder %v1048, 0.0
        %vm1158 = vcmp.gt.f32.partialorder %v1050, 0.0
        %vm1159 = vcmp.gt.f32.partialorder %v1137, 0.0
        %vm1160 = vcmp.gt.f32.partialorder %v1139, 0.0
        %vm1161 = vcmp.gt.f32.partialorder %v1054, 0.0
        %vm1162 = vcmp.gt.f32.partialorder %v1056, 0.0
        %vm1163 = vcmp.gt.f32.partialorder %v1143, 0.0
        %vm1164 = vcmp.gt.f32.partialorder %v1145, 0.0
        %vm1165 = vcmp.gt.f32.partialorder %v1060, 0.0
        %vm1166 = vcmp.gt.f32.partialorder %v1062, 0.0
        %vm1167 = vcmp.gt.f32.partialorder %v1149, 0.0
        %vm1168 = vcmp.gt.f32.partialorder %v1151, 0.0
        %v1169 = vmul.f32 %v1042, 0.2
        %v1170 = vmul.f32 %v1044, 0.2
        %v1171 = vmul.f32 %v1131, 0.2
        %v1172 = vmul.f32 %v1133, 0.2
        %v1173 = vmul.f32 %v1048, 0.2
        %v1174 = vmul.f32 %v1050, 0.2
        %v1175 = vmul.f32 %v1137, 0.2
        %v1176 = vmul.f32 %v1139, 0.2
        %v1177 = vmul.f32 %v1054, 0.2
        %v1178 = vmul.f32 %v1056, 0.2
        %v1179 = vmul.f32 %v1143, 0.2
        %v1180 = vmul.f32 %v1145, 0.2
        %v1181 = vmul.f32 %v1060, 0.2
        %v1182 = vmul.f32 %v1062, 0.2
        %v1183 = vmul.f32 %v1149, 0.2
        %v1184 = vmul.f32 %v1151, 0.2
        %v1185 = vsel %vm1153, %v1042, %v1169
        %v1186 = vsel %vm1154, %v1044, %v1170
        %v1187 = vsel %vm1155, %v1131, %v1171
        %v1188 = vsel %vm1156, %v1133, %v1172
        %v1189 = vsel %vm1157, %v1048, %v1173
        %v1190 = vsel %vm1158, %v1050, %v1174
        %v1191 = vsel %vm1159, %v1137, %v1175
        %v1192 = vsel %vm1160, %v1139, %v1176
        %v1193 = vsel %vm1161, %v1054, %v1177
        %v1194 = vsel %vm1162, %v1056, %v1178
        %v1195 = vsel %vm1163, %v1143, %v1179
        %v1196 = vsel %vm1164, %v1145, %v1180
        %v1197 = vsel %vm1165, %v1060, %v1181
        %v1198 = vsel %vm1166, %v1062, %v1182
        %v1199 = vsel %vm1167, %v1149, %v1183
        %v1200 = vsel %vm1168, %v1151, %v1184
        %v1201 = vld [vmem:[%s5] sm:$0xff]
        %v1202 = vld [vmem:[%s5 + $0x8] sm:$0xff]
        %v1203 = vld [vmem:[%s5 + $0x10] sm:$0xff]
        %v1204 = vld [vmem:[%s5 + $0x18] sm:$0xff]
        %v1205 = vld [vmem:[%s6] sm:$0xff]
        %v1206 = vld [vmem:[%s6 + $0x8] sm:$0xff]
        %v1207 = vld [vmem:[%s6 + $0x10] sm:$0xff]
        %v1208 = vld [vmem:[%s6 + $0x18] sm:$0xff]
        %1210 = vset.pattern.permute.xlu0 0
        %1211 = vperm.xlu0 %1210, %v1205
        %v1212 = vpop.permute.xlu0 %1211
        %1215 = vset.pattern.permute.xlu0 0
        %1216 = vperm.xlu0 %1215, %v1206
        %v1217 = vpop.permute.xlu0 %1216
        %1220 = vset.pattern.permute.xlu0 0
        %1221 = vperm.xlu0 %1220, %v1207
        %v1222 = vpop.permute.xlu0 %1221
        %1225 = vset.pattern.permute.xlu0 0
        %1226 = vperm.xlu0 %1225, %v1208
        %v1227 = vpop.permute.xlu0 %1226
        %v1230 = vsel %vm694, %v1201, 0
        %v1233 = vsel %vm694, %v1202, 0
        %v1236 = vsel %vm694, %v1203, 0
        %v1239 = vsel %vm694, %v1204, 0
        %1241 = vmatprep.subr.mxu0 %v1186
        %1242 = vmatpush1.msra.mxu0 %v1185
        %1243 = vmatprep.subr.mxu0 %v1190
        %1244 = vmatpush1.msra.mxu0 %v1189
        %1245 = vmatprep.subr.mxu0 %v1194
        %1246 = vmatpush1.msra.mxu0 %v1193
        %1247 = vmatprep.subr.mxu0 %v1198
        %1248 = vmatpush1.msra.mxu0 %v1197
        %1249 = vmatprep.subr.mxu0 0.0
        %1250 = vmatpush1.msra.mxu0 0.0
        %1251 = vmatprep.subr.mxu0 0.0
        %1252 = vmatpush1.msra.mxu0 0.0
        %1253 = vmatprep.subr.mxu0 0.0
        %1254 = vmatpush1.msra.mxu0 0.0
        %1255 = vmatprep.subr.mxu0 0.0
        %1256 = vmatpush1.msra.mxu0 0.0
        %1257 = vmatprep.subr.mxu0 0.0
        %1258 = vmatpush1.msra.mxu0 0.0
        %1259 = vmatprep.subr.mxu0 0.0
        %1260 = vmatpush1.msra.mxu0 0.0
        %1261 = vmatprep.subr.mxu0 0.0
        %1262 = vmatpush1.msra.mxu0 0.0
        %1263 = vmatprep.subr.mxu0 0.0
        %1264 = vmatpush1.msra.mxu0 0.0
        %1265 = vmatprep.subr.mxu0 0.0
        %1266 = vmatpush1.msra.mxu0 0.0
        %1267 = vmatprep.subr.mxu0 0.0
        %1268 = vmatpush1.msra.mxu0 0.0
        %1269 = vmatprep.subr.mxu0 0.0
        %1270 = vmatpush1.msra.mxu0 0.0
        %1271 = vmatprep.subr.mxu0 0.0
        %1272 = vmatpush1.msra.mxu0 0.0
        %1273 = vmatprep.subr.mxu0 0.0
        %1274 = vmatpush1.msra.mxu0 0.0
        %1275 = vmatprep.subr.mxu0 0.0
        %1276 = vmatpush1.msra.mxu0 0.0
        %1277 = vmatprep.subr.mxu0 0.0
        %1278 = vmatpush1.msra.mxu0 0.0
        %1279 = vmatprep.subr.mxu0 0.0
        %1280 = vmatpush1.msra.mxu0 0.0
        %1281 = vmatprep.subr.mxu0 0.0
        %1282 = vmatpush1.msra.mxu0 0.0
        %1283 = vmatprep.subr.mxu0 0.0
        %1284 = vmatpush1.msra.mxu0 0.0
        %1285 = vmatprep.subr.mxu0 0.0
        %1286 = vmatpush1.msra.mxu0 0.0
        %1287 = vmatprep.subr.mxu0 0.0
        %1288 = vmatpush1.msra.mxu0 0.0
        %1289 = vmatprep.subr.mxu0 0.0
        %1290 = vmatpush1.msra.mxu0 0.0
        %1291 = vmatprep.subr.mxu0 0.0
        %1292 = vmatpush1.msra.mxu0 0.0
        %1293 = vmatprep.subr.mxu0 0.0
        %1294 = vmatpush1.msra.mxu0 0.0
        %1295 = vmatprep.subr.mxu0 0.0
        %1296 = vmatpush1.msra.mxu0 0.0
        %1297 = vmatprep.subr.mxu0 0.0
        %1298 = vmatpush1.msra.mxu0 0.0
        %1299 = vmatprep.subr.mxu0 0.0
        %1300 = vmatpush1.msra.mxu0 0.0
        %1301 = vmatprep.subr.mxu0 0.0
        %1302 = vmatpush1.msra.mxu0 0.0
        %1303 = vmatprep.subr.mxu0 0.0
        %1304 = vmatpush1.msra.mxu0 0.0
        %1305 = vmatprep.mubr.f32.mxu0 0.0
        %1306 = vmatmul.mubr.f32.gmra.mrb[0].mxu0 %v1230
        %v1307 = vpop.f32.mrb[0].mxu0
        %v1308 = vadd.f32 %v1212, %v1307
        %v1309 = vpop.f32.mrb[0].mxu0
        %v1310 = vadd.f32 %v1212, %v1309
        %1311 = vmatprep.mubr.f32.mxu0 0.0
        %1312 = vmatmul.mubr.f32.gmra.mrb[0].mxu0 %v1233
        %v1313 = vpop.f32.mrb[0].mxu0
        %v1314 = vadd.f32 %v1217, %v1313
        %v1315 = vpop.f32.mrb[0].mxu0
        %v1316 = vadd.f32 %v1217, %v1315
        %1317 = vmatprep.mubr.f32.mxu0 0.0
        %1318 = vmatmul.mubr.f32.gmra.mrb[0].mxu0 %v1236
        %v1319 = vpop.f32.mrb[0].mxu0
        %v1320 = vadd.f32 %v1222, %v1319
        %v1321 = vpop.f32.mrb[0].mxu0
        %v1322 = vadd.f32 %v1222, %v1321
        %1323 = vmatprep.mubr.f32.mxu0 0.0
        %1324 = vmatmul.mubr.f32.gmra.mrb[0].mxu0 %v1239
        %v1325 = vpop.f32.mrb[0].mxu0
        %v1326 = vadd.f32 %v1227, %v1325
        %v1327 = vpop.f32.mrb[0].mxu0
        %v1328 = vadd.f32 %v1227, %v1327
        %1329 = vdwg.mxu0
        %1330 = vmatprep.subr.mxu0 %v1188
        %1331 = vmatpush1.msra.mxu0 %v1187
        %1332 = vmatprep.subr.mxu0 %v1192
        %1333 = vmatpush1.msra.mxu0 %v1191
        %1334 = vmatprep.subr.mxu0 %v1196
        %1335 = vmatpush1.msra.mxu0 %v1195
        %1336 = vmatprep.subr.mxu0 %v1200
        %1337 = vmatpush1.msra.mxu0 %v1199
        %1338 = vmatprep.subr.mxu0 0.0
        %1339 = vmatpush1.msra.mxu0 0.0
        %1340 = vmatprep.subr.mxu0 0.0
        %1341 = vmatpush1.msra.mxu0 0.0
        %1342 = vmatprep.subr.mxu0 0.0
        %1343 = vmatpush1.msra.mxu0 0.0
        %1344 = vmatprep.subr.mxu0 0.0
        %1345 = vmatpush1.msra.mxu0 0.0
        %1346 = vmatprep.subr.mxu0 0.0
        %1347 = vmatpush1.msra.mxu0 0.0
        %1348 = vmatprep.subr.mxu0 0.0
        %1349 = vmatpush1.msra.mxu0 0.0
        %1350 = vmatprep.subr.mxu0 0.0
        %1351 = vmatpush1.msra.mxu0 0.0
        %1352 = vmatprep.subr.mxu0 0.0
        %1353 = vmatpush1.msra.mxu0 0.0
        %1354 = vmatprep.subr.mxu0 0.0
        %1355 = vmatpush1.msra.mxu0 0.0
        %1356 = vmatprep.subr.mxu0 0.0
        %1357 = vmatpush1.msra.mxu0 0.0
        %1358 = vmatprep.subr.mxu0 0.0
        %1359 = vmatpush1.msra.mxu0 0.0
        %1360 = vmatprep.subr.mxu0 0.0
        %1361 = vmatpush1.msra.mxu0 0.0
        %1362 = vmatprep.subr.mxu0 0.0
        %1363 = vmatpush1.msra.mxu0 0.0
        %1364 = vmatprep.subr.mxu0 0.0
        %1365 = vmatpush1.msra.mxu0 0.0
        %1366 = vmatprep.subr.mxu0 0.0
        %1367 = vmatpush1.msra.mxu0 0.0
        %1368 = vmatprep.subr.mxu0 0.0
        %1369 = vmatpush1.msra.mxu0 0.0
        %1370 = vmatprep.subr.mxu0 0.0
        %1371 = vmatpush1.msra.mxu0 0.0
        %1372 = vmatprep.subr.mxu0 0.0
        %1373 = vmatpush1.msra.mxu0 0.0
        %1374 = vmatprep.subr.mxu0 0.0
        %1375 = vmatpush1.msra.mxu0 0.0
        %1376 = vmatprep.subr.mxu0 0.0
        %1377 = vmatpush1.msra.mxu0 0.0
        %1378 = vmatprep.subr.mxu0 0.0
        %1379 = vmatpush1.msra.mxu0 0.0
        %1380 = vmatprep.subr.mxu0 0.0
        %1381 = vmatpush1.msra.mxu0 0.0
        %1382 = vmatprep.subr.mxu0 0.0
        %1383 = vmatpush1.msra.mxu0 0.0
        %1384 = vmatprep.subr.mxu0 0.0
        %1385 = vmatpush1.msra.mxu0 0.0
        %1386 = vmatprep.subr.mxu0 0.0
        %1387 = vmatpush1.msra.mxu0 0.0
        %1388 = vmatprep.subr.mxu0 0.0
        %1389 = vmatpush1.msra.mxu0 0.0
        %1390 = vmatprep.subr.mxu0 0.0
        %1391 = vmatpush1.msra.mxu0 0.0
        %1392 = vmatprep.subr.mxu0 0.0
        %1393 = vmatpush1.msra.mxu0 0.0
        %1394 = vmatprep.mubr.f32.mxu0 0.0
        %1395 = vmatmul.mubr.f32.gmra.mrb[0].mxu0 %v1230
        %v1396 = vpop.f32.mrb[0].mxu0
        %v1397 = vadd.f32 %v1212, %v1396
        %v1398 = vpop.f32.mrb[0].mxu0
        %v1399 = vadd.f32 %v1212, %v1398
        %1400 = vmatprep.mubr.f32.mxu0 0.0
        %1401 = vmatmul.mubr.f32.gmra.mrb[0].mxu0 %v1233
        %v1402 = vpop.f32.mrb[0].mxu0
        %v1403 = vadd.f32 %v1217, %v1402
        %v1404 = vpop.f32.mrb[0].mxu0
        %v1405 = vadd.f32 %v1217, %v1404
        %1406 = vmatprep.mubr.f32.mxu0 0.0
        %1407 = vmatmul.mubr.f32.gmra.mrb[0].mxu0 %v1236
        %v1408 = vpop.f32.mrb[0].mxu0
        %v1409 = vadd.f32 %v1222, %v1408
        %v1410 = vpop.f32.mrb[0].mxu0
        %v1411 = vadd.f32 %v1222, %v1410
        %1412 = vmatprep.mubr.f32.mxu0 0.0
        %1413 = vmatmul.mubr.f32.gmra.mrb[0].mxu0 %v1239
        %v1414 = vpop.f32.mrb[0].mxu0
        %v1415 = vadd.f32 %v1227, %v1414
        %v1416 = vpop.f32.mrb[0].mxu0
        %v1417 = vadd.f32 %v1227, %v1416
        %1418 = vdwg.mxu0
        %s1419 = scalar_lea.vmem %s3, 64
        %v1420 = vld [vmem:[%s1419] sm:$0xff]
        %v1421 = vld [vmem:[%s1419 + $0x8] sm:$0xff]
        %v1422 = vld [vmem:[%s1419 + $0x10] sm:$0xff]
        %v1423 = vld [vmem:[%s1419 + $0x18] sm:$0xff]
        %s1424 = scalar_lea.vmem %s4, 64
        %v1425 = vld [vmem:[%s1424] sm:$0xff]
        %v1426 = vld [vmem:[%s1424 + $0x8] sm:$0xff]
        %v1427 = vld [vmem:[%s1424 + $0x10] sm:$0xff]
        %v1428 = vld [vmem:[%s1424 + $0x18] sm:$0xff]
        %1430 = vset.pattern.permute.xlu0 0
        %1431 = vperm.xlu0 %1430, %v1425
        %v1432 = vpop.permute.xlu0 %1431
        %1435 = vset.pattern.permute.xlu0 0
        %1436 = vperm.xlu0 %1435, %v1426
        %v1437 = vpop.permute.xlu0 %1436
        %1440 = vset.pattern.permute.xlu0 0
        %1441 = vperm.xlu0 %1440, %v1427
        %v1442 = vpop.permute.xlu0 %1441
        %1445 = vset.pattern.permute.xlu0 0
        %1446 = vperm.xlu0 %1445, %v1428
        %v1447 = vpop.permute.xlu0 %1446
        %v1450 = vsel %vm694, %v1420, 0
        %v1453 = vsel %vm694, %v1421, 0
        %v1456 = vsel %vm694, %v1422, 0
        %v1459 = vsel %vm694, %v1423, 0
        %1461 = vmatprep.subr.mxu0 %v1310
        %1462 = vmatpush1.msra.mxu0 %v1308
        %1463 = vmatprep.subr.mxu0 %v1316
        %1464 = vmatpush1.msra.mxu0 %v1314
        %1465 = vmatprep.subr.mxu0 %v1322
        %1466 = vmatpush1.msra.mxu0 %v1320
        %1467 = vmatprep.subr.mxu0 %v1328
        %1468 = vmatpush1.msra.mxu0 %v1326
        %1469 = vmatprep.subr.mxu0 0.0
        %1470 = vmatpush1.msra.mxu0 0.0
        %1471 = vmatprep.subr.mxu0 0.0
        %1472 = vmatpush1.msra.mxu0 0.0
        %1473 = vmatprep.subr.mxu0 0.0
        %1474 = vmatpush1.msra.mxu0 0.0
        %1475 = vmatprep.subr.mxu0 0.0
        %1476 = vmatpush1.msra.mxu0 0.0
        %1477 = vmatprep.subr.mxu0 0.0
        %1478 = vmatpush1.msra.mxu0 0.0
        %1479 = vmatprep.subr.mxu0 0.0
        %1480 = vmatpush1.msra.mxu0 0.0
        %1481 = vmatprep.subr.mxu0 0.0
        %1482 = vmatpush1.msra.mxu0 0.0
        %1483 = vmatprep.subr.mxu0 0.0
        %1484 = vmatpush1.msra.mxu0 0.0
        %1485 = vmatprep.subr.mxu0 0.0
        %1486 = vmatpush1.msra.mxu0 0.0
        %1487 = vmatprep.subr.mxu0 0.0
        %1488 = vmatpush1.msra.mxu0 0.0
        %1489 = vmatprep.subr.mxu0 0.0
        %1490 = vmatpush1.msra.mxu0 0.0
        %1491 = vmatprep.subr.mxu0 0.0
        %1492 = vmatpush1.msra.mxu0 0.0
        %1493 = vmatprep.subr.mxu0 0.0
        %1494 = vmatpush1.msra.mxu0 0.0
        %1495 = vmatprep.subr.mxu0 0.0
        %1496 = vmatpush1.msra.mxu0 0.0
        %1497 = vmatprep.subr.mxu0 0.0
        %1498 = vmatpush1.msra.mxu0 0.0
        %1499 = vmatprep.subr.mxu0 0.0
        %1500 = vmatpush1.msra.mxu0 0.0
        %1501 = vmatprep.subr.mxu0 0.0
        %1502 = vmatpush1.msra.mxu0 0.0
        %1503 = vmatprep.subr.mxu0 0.0
        %1504 = vmatpush1.msra.mxu0 0.0
        %1505 = vmatprep.subr.mxu0 0.0
        %1506 = vmatpush1.msra.mxu0 0.0
        %1507 = vmatprep.subr.mxu0 0.0
        %1508 = vmatpush1.msra.mxu0 0.0
        %1509 = vmatprep.subr.mxu0 0.0
        %1510 = vmatpush1.msra.mxu0 0.0
        %1511 = vmatprep.subr.mxu0 0.0
        %1512 = vmatpush1.msra.mxu0 0.0
        %1513 = vmatprep.subr.mxu0 0.0
        %1514 = vmatpush1.msra.mxu0 0.0
        %1515 = vmatprep.subr.mxu0 0.0
        %1516 = vmatpush1.msra.mxu0 0.0
        %1517 = vmatprep.subr.mxu0 0.0
        %1518 = vmatpush1.msra.mxu0 0.0
        %1519 = vmatprep.subr.mxu0 0.0
        %1520 = vmatpush1.msra.mxu0 0.0
        %1521 = vmatprep.subr.mxu0 0.0
        %1522 = vmatpush1.msra.mxu0 0.0
        %1523 = vmatprep.subr.mxu0 0.0
        %1524 = vmatpush1.msra.mxu0 0.0
        %1525 = vmatprep.mubr.f32.mxu0 0.0
        %1526 = vmatmul.mubr.f32.gmra.mrb[0].mxu0 %v1450
        %v1527 = vpop.f32.mrb[0].mxu0
        %v1528 = vadd.f32 %v1432, %v1527
        %v1529 = vpop.f32.mrb[0].mxu0
        %v1530 = vadd.f32 %v1432, %v1529
        %1531 = vmatprep.mubr.f32.mxu0 0.0
        %1532 = vmatmul.mubr.f32.gmra.mrb[0].mxu0 %v1453
        %v1533 = vpop.f32.mrb[0].mxu0
        %v1534 = vadd.f32 %v1437, %v1533
        %v1535 = vpop.f32.mrb[0].mxu0
        %v1536 = vadd.f32 %v1437, %v1535
        %1537 = vmatprep.mubr.f32.mxu0 0.0
        %1538 = vmatmul.mubr.f32.gmra.mrb[0].mxu0 %v1456
        %v1539 = vpop.f32.mrb[0].mxu0
        %v1540 = vadd.f32 %v1442, %v1539
        %v1541 = vpop.f32.mrb[0].mxu0
        %v1542 = vadd.f32 %v1442, %v1541
        %1543 = vmatprep.mubr.f32.mxu0 0.0
        %1544 = vmatmul.mubr.f32.gmra.mrb[0].mxu0 %v1459
        %v1545 = vpop.f32.mrb[0].mxu0
        %v1546 = vadd.f32 %v1447, %v1545
        %v1547 = vpop.f32.mrb[0].mxu0
        %v1548 = vadd.f32 %v1447, %v1547
        %1549 = vdwg.mxu0
        %1550 = vmatprep.subr.mxu0 %v1399
        %1551 = vmatpush1.msra.mxu0 %v1397
        %1552 = vmatprep.subr.mxu0 %v1405
        %1553 = vmatpush1.msra.mxu0 %v1403
        %1554 = vmatprep.subr.mxu0 %v1411
        %1555 = vmatpush1.msra.mxu0 %v1409
        %1556 = vmatprep.subr.mxu0 %v1417
        %1557 = vmatpush1.msra.mxu0 %v1415
        %1558 = vmatprep.subr.mxu0 0.0
        %1559 = vmatpush1.msra.mxu0 0.0
        %1560 = vmatprep.subr.mxu0 0.0
        %1561 = vmatpush1.msra.mxu0 0.0
        %1562 = vmatprep.subr.mxu0 0.0
        %1563 = vmatpush1.msra.mxu0 0.0
        %1564 = vmatprep.subr.mxu0 0.0
        %1565 = vmatpush1.msra.mxu0 0.0
        %1566 = vmatprep.subr.mxu0 0.0
        %1567 = vmatpush1.msra.mxu0 0.0
        %1568 = vmatprep.subr.mxu0 0.0
        %1569 = vmatpush1.msra.mxu0 0.0
        %1570 = vmatprep.subr.mxu0 0.0
        %1571 = vmatpush1.msra.mxu0 0.0
        %1572 = vmatprep.subr.mxu0 0.0
        %1573 = vmatpush1.msra.mxu0 0.0
        %1574 = vmatprep.subr.mxu0 0.0
        %1575 = vmatpush1.msra.mxu0 0.0
        %1576 = vmatprep.subr.mxu0 0.0
        %1577 = vmatpush1.msra.mxu0 0.0
        %1578 = vmatprep.subr.mxu0 0.0
        %1579 = vmatpush1.msra.mxu0 0.0
        %1580 = vmatprep.subr.mxu0 0.0
        %1581 = vmatpush1.msra.mxu0 0.0
        %1582 = vmatprep.subr.mxu0 0.0
        %1583 = vmatpush1.msra.mxu0 0.0
        %1584 = vmatprep.subr.mxu0 0.0
        %1585 = vmatpush1.msra.mxu0 0.0
        %1586 = vmatprep.subr.mxu0 0.0
        %1587 = vmatpush1.msra.mxu0 0.0
        %1588 = vmatprep.subr.mxu0 0.0
        %1589 = vmatpush1.msra.mxu0 0.0
        %1590 = vmatprep.subr.mxu0 0.0
        %1591 = vmatpush1.msra.mxu0 0.0
        %1592 = vmatprep.subr.mxu0 0.0
        %1593 = vmatpush1.msra.mxu0 0.0
        %1594 = vmatprep.subr.mxu0 0.0
        %1595 = vmatpush1.msra.mxu0 0.0
        %1596 = vmatprep.subr.mxu0 0.0
        %1597 = vmatpush1.msra.mxu0 0.0
        %1598 = vmatprep.subr.mxu0 0.0
        %1599 = vmatpush1.msra.mxu0 0.0
        %1600 = vmatprep.subr.mxu0 0.0
        %1601 = vmatpush1.msra.mxu0 0.0
        %1602 = vmatprep.subr.mxu0 0.0
        %1603 = vmatpush1.msra.mxu0 0.0
        %1604 = vmatprep.subr.mxu0 0.0
        %1605 = vmatpush1.msra.mxu0 0.0
        %1606 = vmatprep.subr.mxu0 0.0
        %1607 = vmatpush1.msra.mxu0 0.0
        %1608 = vmatprep.subr.mxu0 0.0
        %1609 = vmatpush1.msra.mxu0 0.0
        %1610 = vmatprep.subr.mxu0 0.0
        %1611 = vmatpush1.msra.mxu0 0.0
        %1612 = vmatprep.subr.mxu0 0.0
        %1613 = vmatpush1.msra.mxu0 0.0
        %1614 = vmatprep.mubr.f32.mxu0 0.0
        %1615 = vmatmul.mubr.f32.gmra.mrb[0].mxu0 %v1450
        %v1616 = vpop.f32.mrb[0].mxu0
        %v1617 = vadd.f32 %v1432, %v1616
        %v1618 = vpop.f32.mrb[0].mxu0
        %v1619 = vadd.f32 %v1432, %v1618
        %1620 = vmatprep.mubr.f32.mxu0 0.0
        %1621 = vmatmul.mubr.f32.gmra.mrb[0].mxu0 %v1453
        %v1622 = vpop.f32.mrb[0].mxu0
        %v1623 = vadd.f32 %v1437, %v1622
        %v1624 = vpop.f32.mrb[0].mxu0
        %v1625 = vadd.f32 %v1437, %v1624
        %1626 = vmatprep.mubr.f32.mxu0 0.0
        %1627 = vmatmul.mubr.f32.gmra.mrb[0].mxu0 %v1456
        %v1628 = vpop.f32.mrb[0].mxu0
        %v1629 = vadd.f32 %v1442, %v1628
        %v1630 = vpop.f32.mrb[0].mxu0
        %v1631 = vadd.f32 %v1442, %v1630
        %1632 = vmatprep.mubr.f32.mxu0 0.0
        %1633 = vmatmul.mubr.f32.gmra.mrb[0].mxu0 %v1459
        %v1634 = vpop.f32.mrb[0].mxu0
        %v1635 = vadd.f32 %v1447, %v1634
        %v1636 = vpop.f32.mrb[0].mxu0
        %v1637 = vadd.f32 %v1447, %v1636
        %1638 = vdwg.mxu0
        %vm1639 = vcmp.gt.f32.partialorder %v1528, 0.0
        %vm1640 = vcmp.gt.f32.partialorder %v1530, 0.0
        %vm1641 = vcmp.gt.f32.partialorder %v1617, 0.0
        %vm1642 = vcmp.gt.f32.partialorder %v1619, 0.0
        %vm1643 = vcmp.gt.f32.partialorder %v1534, 0.0
        %vm1644 = vcmp.gt.f32.partialorder %v1536, 0.0
        %vm1645 = vcmp.gt.f32.partialorder %v1623, 0.0
        %vm1646 = vcmp.gt.f32.partialorder %v1625, 0.0
        %vm1647 = vcmp.gt.f32.partialorder %v1540, 0.0
        %vm1648 = vcmp.gt.f32.partialorder %v1542, 0.0
        %vm1649 = vcmp.gt.f32.partialorder %v1629, 0.0
        %vm1650 = vcmp.gt.f32.partialorder %v1631, 0.0
        %vm1651 = vcmp.gt.f32.partialorder %v1546, 0.0
        %vm1652 = vcmp.gt.f32.partialorder %v1548, 0.0
        %vm1653 = vcmp.gt.f32.partialorder %v1635, 0.0
        %vm1654 = vcmp.gt.f32.partialorder %v1637, 0.0
        %v1655 = vmul.f32 %v1528, 0.2
        %v1656 = vmul.f32 %v1530, 0.2
        %v1657 = vmul.f32 %v1617, 0.2
        %v1658 = vmul.f32 %v1619, 0.2
        %v1659 = vmul.f32 %v1534, 0.2
        %v1660 = vmul.f32 %v1536, 0.2
        %v1661 = vmul.f32 %v1623, 0.2
        %v1662 = vmul.f32 %v1625, 0.2
        %v1663 = vmul.f32 %v1540, 0.2
        %v1664 = vmul.f32 %v1542, 0.2
        %v1665 = vmul.f32 %v1629, 0.2
        %v1666 = vmul.f32 %v1631, 0.2
        %v1667 = vmul.f32 %v1546, 0.2
        %v1668 = vmul.f32 %v1548, 0.2
        %v1669 = vmul.f32 %v1635, 0.2
        %v1670 = vmul.f32 %v1637, 0.2
        %v1671 = vsel %vm1639, %v1528, %v1655
        %v1672 = vsel %vm1640, %v1530, %v1656
        %v1673 = vsel %vm1641, %v1617, %v1657
        %v1674 = vsel %vm1642, %v1619, %v1658
        %v1675 = vsel %vm1643, %v1534, %v1659
        %v1676 = vsel %vm1644, %v1536, %v1660
        %v1677 = vsel %vm1645, %v1623, %v1661
        %v1678 = vsel %vm1646, %v1625, %v1662
        %v1679 = vsel %vm1647, %v1540, %v1663
        %v1680 = vsel %vm1648, %v1542, %v1664
        %v1681 = vsel %vm1649, %v1629, %v1665
        %v1682 = vsel %vm1650, %v1631, %v1666
        %v1683 = vsel %vm1651, %v1546, %v1667
        %v1684 = vsel %vm1652, %v1548, %v1668
        %v1685 = vsel %vm1653, %v1635, %v1669
        %v1686 = vsel %vm1654, %v1637, %v1670
        %s1687 = scalar_lea.vmem %s5, 32
        %v1688 = vld [vmem:[%s1687] sm:$0xff]
        %v1689 = vld [vmem:[%s1687 + $0x8] sm:$0xff]
        %v1690 = vld [vmem:[%s1687 + $0x10] sm:$0xff]
        %v1691 = vld [vmem:[%s1687 + $0x18] sm:$0xff]
        %s1692 = scalar_lea.vmem %s6, 32
        %v1693 = vld [vmem:[%s1692] sm:$0xff]
        %v1694 = vld [vmem:[%s1692 + $0x8] sm:$0xff]
        %v1695 = vld [vmem:[%s1692 + $0x10] sm:$0xff]
        %v1696 = vld [vmem:[%s1692 + $0x18] sm:$0xff]
        %1698 = vset.pattern.permute.xlu0 0
        %1699 = vperm.xlu0 %1698, %v1693
        %v1700 = vpop.permute.xlu0 %1699
        %1703 = vset.pattern.permute.xlu0 0
        %1704 = vperm.xlu0 %1703, %v1694
        %v1705 = vpop.permute.xlu0 %1704
        %1708 = vset.pattern.permute.xlu0 0
        %1709 = vperm.xlu0 %1708, %v1695
        %v1710 = vpop.permute.xlu0 %1709
        %1713 = vset.pattern.permute.xlu0 0
        %1714 = vperm.xlu0 %1713, %v1696
        %v1715 = vpop.permute.xlu0 %1714
        %v1718 = vsel %vm694, %v1688, 0
        %v1721 = vsel %vm694, %v1689, 0
        %v1724 = vsel %vm694, %v1690, 0
        %v1727 = vsel %vm694, %v1691, 0
        %1729 = vmatprep.subr.mxu0 %v1672
        %1730 = vmatpush1.msra.mxu0 %v1671
        %1731 = vmatprep.subr.mxu0 %v1676
        %1732 = vmatpush1.msra.mxu0 %v1675
        %1733 = vmatprep.subr.mxu0 %v1680
        %1734 = vmatpush1.msra.mxu0 %v1679
        %1735 = vmatprep.subr.mxu0 %v1684
        %1736 = vmatpush1.msra.mxu0 %v1683
        %1737 = vmatprep.subr.mxu0 0.0
        %1738 = vmatpush1.msra.mxu0 0.0
        %1739 = vmatprep.subr.mxu0 0.0
        %1740 = vmatpush1.msra.mxu0 0.0
        %1741 = vmatprep.subr.mxu0 0.0
        %1742 = vmatpush1.msra.mxu0 0.0
        %1743 = vmatprep.subr.mxu0 0.0
        %1744 = vmatpush1.msra.mxu0 0.0
        %1745 = vmatprep.subr.mxu0 0.0
        %1746 = vmatpush1.msra.mxu0 0.0
        %1747 = vmatprep.subr.mxu0 0.0
        %1748 = vmatpush1.msra.mxu0 0.0
        %1749 = vmatprep.subr.mxu0 0.0
        %1750 = vmatpush1.msra.mxu0 0.0
        %1751 = vmatprep.subr.mxu0 0.0
        %1752 = vmatpush1.msra.mxu0 0.0
        %1753 = vmatprep.subr.mxu0 0.0
        %1754 = vmatpush1.msra.mxu0 0.0
        %1755 = vmatprep.subr.mxu0 0.0
        %1756 = vmatpush1.msra.mxu0 0.0
        %1757 = vmatprep.subr.mxu0 0.0
        %1758 = vmatpush1.msra.mxu0 0.0
        %1759 = vmatprep.subr.mxu0 0.0
        %1760 = vmatpush1.msra.mxu0 0.0
        %1761 = vmatprep.subr.mxu0 0.0
        %1762 = vmatpush1.msra.mxu0 0.0
        %1763 = vmatprep.subr.mxu0 0.0
        %1764 = vmatpush1.msra.mxu0 0.0
        %1765 = vmatprep.subr.mxu0 0.0
        %1766 = vmatpush1.msra.mxu0 0.0
        %1767 = vmatprep.subr.mxu0 0.0
        %1768 = vmatpush1.msra.mxu0 0.0
        %1769 = vmatprep.subr.mxu0 0.0
        %1770 = vmatpush1.msra.mxu0 0.0
        %1771 = vmatprep.subr.mxu0 0.0
        %1772 = vmatpush1.msra.mxu0 0.0
        %1773 = vmatprep.subr.mxu0 0.0
        %1774 = vmatpush1.msra.mxu0 0.0
        %1775 = vmatprep.subr.mxu0 0.0
        %1776 = vmatpush1.msra.mxu0 0.0
        %1777 = vmatprep.subr.mxu0 0.0
        %1778 = vmatpush1.msra.mxu0 0.0
        %1779 = vmatprep.subr.mxu0 0.0
        %1780 = vmatpush1.msra.mxu0 0.0
        %1781 = vmatprep.subr.mxu0 0.0
        %1782 = vmatpush1.msra.mxu0 0.0
        %1783 = vmatprep.subr.mxu0 0.0
        %1784 = vmatpush1.msra.mxu0 0.0
        %1785 = vmatprep.subr.mxu0 0.0
        %1786 = vmatpush1.msra.mxu0 0.0
        %1787 = vmatprep.subr.mxu0 0.0
        %1788 = vmatpush1.msra.mxu0 0.0
        %1789 = vmatprep.subr.mxu0 0.0
        %1790 = vmatpush1.msra.mxu0 0.0
        %1791 = vmatprep.subr.mxu0 0.0
        %1792 = vmatpush1.msra.mxu0 0.0
        %1793 = vmatprep.mubr.f32.mxu0 0.0
        %1794 = vmatmul.mubr.f32.gmra.mrb[0].mxu0 %v1718
        %v1795 = vpop.f32.mrb[0].mxu0
        %v1796 = vadd.f32 %v1700, %v1795
        %v1797 = vpop.f32.mrb[0].mxu0
        %v1798 = vadd.f32 %v1700, %v1797
        %1799 = vmatprep.mubr.f32.mxu0 0.0
        %1800 = vmatmul.mubr.f32.gmra.mrb[0].mxu0 %v1721
        %v1801 = vpop.f32.mrb[0].mxu0
        %v1802 = vadd.f32 %v1705, %v1801
        %v1803 = vpop.f32.mrb[0].mxu0
        %v1804 = vadd.f32 %v1705, %v1803
        %1805 = vmatprep.mubr.f32.mxu0 0.0
        %1806 = vmatmul.mubr.f32.gmra.mrb[0].mxu0 %v1724
        %v1807 = vpop.f32.mrb[0].mxu0
        %v1808 = vadd.f32 %v1710, %v1807
        %v1809 = vpop.f32.mrb[0].mxu0
        %v1810 = vadd.f32 %v1710, %v1809
        %1811 = vmatprep.mubr.f32.mxu0 0.0
        %1812 = vmatmul.mubr.f32.gmra.mrb[0].mxu0 %v1727
        %v1813 = vpop.f32.mrb[0].mxu0
        %v1814 = vadd.f32 %v1715, %v1813
        %v1815 = vpop.f32.mrb[0].mxu0
        %v1816 = vadd.f32 %v1715, %v1815
        %1817 = vdwg.mxu0
        %1818 = vmatprep.subr.mxu0 %v1674
        %1819 = vmatpush1.msra.mxu0 %v1673
        %1820 = vmatprep.subr.mxu0 %v1678
        %1821 = vmatpush1.msra.mxu0 %v1677
        %1822 = vmatprep.subr.mxu0 %v1682
        %1823 = vmatpush1.msra.mxu0 %v1681
        %1824 = vmatprep.subr.mxu0 %v1686
        %1825 = vmatpush1.msra.mxu0 %v1685
        %1826 = vmatprep.subr.mxu0 0.0
        %1827 = vmatpush1.msra.mxu0 0.0
        %1828 = vmatprep.subr.mxu0 0.0
        %1829 = vmatpush1.msra.mxu0 0.0
        %1830 = vmatprep.subr.mxu0 0.0
        %1831 = vmatpush1.msra.mxu0 0.0
        %1832 = vmatprep.subr.mxu0 0.0
        %1833 = vmatpush1.msra.mxu0 0.0
        %1834 = vmatprep.subr.mxu0 0.0
        %1835 = vmatpush1.msra.mxu0 0.0
        %1836 = vmatprep.subr.mxu0 0.0
        %1837 = vmatpush1.msra.mxu0 0.0
        %1838 = vmatprep.subr.mxu0 0.0
        %1839 = vmatpush1.msra.mxu0 0.0
        %1840 = vmatprep.subr.mxu0 0.0
        %1841 = vmatpush1.msra.mxu0 0.0
        %1842 = vmatprep.subr.mxu0 0.0
        %1843 = vmatpush1.msra.mxu0 0.0
        %1844 = vmatprep.subr.mxu0 0.0
        %1845 = vmatpush1.msra.mxu0 0.0
        %1846 = vmatprep.subr.mxu0 0.0
        %1847 = vmatpush1.msra.mxu0 0.0
        %1848 = vmatprep.subr.mxu0 0.0
        %1849 = vmatpush1.msra.mxu0 0.0
        %1850 = vmatprep.subr.mxu0 0.0
        %1851 = vmatpush1.msra.mxu0 0.0
        %1852 = vmatprep.subr.mxu0 0.0
        %1853 = vmatpush1.msra.mxu0 0.0
        %1854 = vmatprep.subr.mxu0 0.0
        %1855 = vmatpush1.msra.mxu0 0.0
        %1856 = vmatprep.subr.mxu0 0.0
        %1857 = vmatpush1.msra.mxu0 0.0
        %1858 = vmatprep.subr.mxu0 0.0
        %1859 = vmatpush1.msra.mxu0 0.0
        %1860 = vmatprep.subr.mxu0 0.0
        %1861 = vmatpush1.msra.mxu0 0.0
        %1862 = vmatprep.subr.mxu0 0.0
        %1863 = vmatpush1.msra.mxu0 0.0
        %1864 = vmatprep.subr.mxu0 0.0
        %1865 = vmatpush1.msra.mxu0 0.0
        %1866 = vmatprep.subr.mxu0 0.0
        %1867 = vmatpush1.msra.mxu0 0.0
        %1868 = vmatprep.subr.mxu0 0.0
        %1869 = vmatpush1.msra.mxu0 0.0
        %1870 = vmatprep.subr.mxu0 0.0
        %1871 = vmatpush1.msra.mxu0 0.0
        %1872 = vmatprep.subr.mxu0 0.0
        %1873 = vmatpush1.msra.mxu0 0.0
        %1874 = vmatprep.subr.mxu0 0.0
        %1875 = vmatpush1.msra.mxu0 0.0
        %1876 = vmatprep.subr.mxu0 0.0
        %1877 = vmatpush1.msra.mxu0 0.0
        %1878 = vmatprep.subr.mxu0 0.0
        %1879 = vmatpush1.msra.mxu0 0.0
        %1880 = vmatprep.subr.mxu0 0.0
        %1881 = vmatpush1.msra.mxu0 0.0
        %1882 = vmatprep.mubr.f32.mxu0 0.0
        %1883 = vmatmul.mubr.f32.gmra.mrb[0].mxu0 %v1718
        %v1884 = vpop.f32.mrb[0].mxu0
        %v1885 = vadd.f32 %v1700, %v1884
        %v1886 = vpop.f32.mrb[0].mxu0
        %v1887 = vadd.f32 %v1700, %v1886
        %1888 = vmatprep.mubr.f32.mxu0 0.0
        %1889 = vmatmul.mubr.f32.gmra.mrb[0].mxu0 %v1721
        %v1890 = vpop.f32.mrb[0].mxu0
        %v1891 = vadd.f32 %v1705, %v1890
        %v1892 = vpop.f32.mrb[0].mxu0
        %v1893 = vadd.f32 %v1705, %v1892
        %1894 = vmatprep.mubr.f32.mxu0 0.0
        %1895 = vmatmul.mubr.f32.gmra.mrb[0].mxu0 %v1724
        %v1896 = vpop.f32.mrb[0].mxu0
        %v1897 = vadd.f32 %v1710, %v1896
        %v1898 = vpop.f32.mrb[0].mxu0
        %v1899 = vadd.f32 %v1710, %v1898
        %1900 = vmatprep.mubr.f32.mxu0 0.0
        %1901 = vmatmul.mubr.f32.gmra.mrb[0].mxu0 %v1727
        %v1902 = vpop.f32.mrb[0].mxu0
        %v1903 = vadd.f32 %v1715, %v1902
        %v1904 = vpop.f32.mrb[0].mxu0
        %v1905 = vadd.f32 %v1715, %v1904
        %1906 = vdwg.mxu0
        %v1907 = vld [vmem:[%s7] sm:$0x1]
        %v1908 = vld [vmem:[#allocation2] sm:$0x1]
        %1910 = vset.pattern.permute.xlu0 0
        %1911 = vperm.xlu0 %1910, %v1908
        %v1912 = vpop.permute.xlu0 %1911
        %v1914 = vlaneseq
        %v1915 = vshrl.u32 %v1914, 7
        %v1916 = vsub.s32 0, %v1915
        %v1917 = vrot.slane %v1912, %v1916
        %v1919 = vsel %vm694, %v1907, 0
        %1921 = vmatprep.subr.mxu0 %v1798
        %1922 = vmatpush1.msra.mxu0 %v1796
        %1923 = vmatprep.subr.mxu0 %v1804
        %1924 = vmatpush1.msra.mxu0 %v1802
        %1925 = vmatprep.subr.mxu0 %v1810
        %1926 = vmatpush1.msra.mxu0 %v1808
        %1927 = vmatprep.subr.mxu0 %v1816
        %1928 = vmatpush1.msra.mxu0 %v1814
        %1929 = vmatprep.subr.mxu0 0.0
        %1930 = vmatpush1.msra.mxu0 0.0
        %1931 = vmatprep.subr.mxu0 0.0
        %1932 = vmatpush1.msra.mxu0 0.0
        %1933 = vmatprep.subr.mxu0 0.0
        %1934 = vmatpush1.msra.mxu0 0.0
        %1935 = vmatprep.subr.mxu0 0.0
        %1936 = vmatpush1.msra.mxu0 0.0
        %1937 = vmatprep.subr.mxu0 0.0
        %1938 = vmatpush1.msra.mxu0 0.0
        %1939 = vmatprep.subr.mxu0 0.0
        %1940 = vmatpush1.msra.mxu0 0.0
        %1941 = vmatprep.subr.mxu0 0.0
        %1942 = vmatpush1.msra.mxu0 0.0
        %1943 = vmatprep.subr.mxu0 0.0
        %1944 = vmatpush1.msra.mxu0 0.0
        %1945 = vmatprep.subr.mxu0 0.0
        %1946 = vmatpush1.msra.mxu0 0.0
        %1947 = vmatprep.subr.mxu0 0.0
        %1948 = vmatpush1.msra.mxu0 0.0
        %1949 = vmatprep.subr.mxu0 0.0
        %1950 = vmatpush1.msra.mxu0 0.0
        %1951 = vmatprep.subr.mxu0 0.0
        %1952 = vmatpush1.msra.mxu0 0.0
        %1953 = vmatprep.subr.mxu0 0.0
        %1954 = vmatpush1.msra.mxu0 0.0
        %1955 = vmatprep.subr.mxu0 0.0
        %1956 = vmatpush1.msra.mxu0 0.0
        %1957 = vmatprep.subr.mxu0 0.0
        %1958 = vmatpush1.msra.mxu0 0.0
        %1959 = vmatprep.subr.mxu0 0.0
        %1960 = vmatpush1.msra.mxu0 0.0
        %1961 = vmatprep.subr.mxu0 0.0
        %1962 = vmatpush1.msra.mxu0 0.0
        %1963 = vmatprep.subr.mxu0 0.0
        %1964 = vmatpush1.msra.mxu0 0.0
        %1965 = vmatprep.subr.mxu0 0.0
        %1966 = vmatpush1.msra.mxu0 0.0
        %1967 = vmatprep.subr.mxu0 0.0
        %1968 = vmatpush1.msra.mxu0 0.0
        %1969 = vmatprep.subr.mxu0 0.0
        %1970 = vmatpush1.msra.mxu0 0.0
        %1971 = vmatprep.subr.mxu0 0.0
        %1972 = vmatpush1.msra.mxu0 0.0
        %1973 = vmatprep.subr.mxu0 0.0
        %1974 = vmatpush1.msra.mxu0 0.0
        %1975 = vmatprep.subr.mxu0 0.0
        %1976 = vmatpush1.msra.mxu0 0.0
        %1977 = vmatprep.subr.mxu0 0.0
        %1978 = vmatpush1.msra.mxu0 0.0
        %1979 = vmatprep.subr.mxu0 0.0
        %1980 = vmatpush1.msra.mxu0 0.0
        %1981 = vmatprep.subr.mxu0 0.0
        %1982 = vmatpush1.msra.mxu0 0.0
        %1983 = vmatprep.subr.mxu0 0.0
        %1984 = vmatpush1.msra.mxu0 0.0
        %1985 = vmatprep.mubr.f32.mxu0 0.0
        %1986 = vmatmul.mubr.f32.gmra.mrb[0].mxu0 %v1919
        %v1987 = vpop.f32.mrb[0].mxu0
        %v1988 = vadd.f32 %v1917, %v1987
        %v1989 = vpop.f32.mrb[0].mxu0
        %v1990 = vadd.f32 %v1917, %v1989
        %1991 = vdwg.mxu0
        %1992 = vmatprep.subr.mxu0 %v1887
        %1993 = vmatpush1.msra.mxu0 %v1885
        %1994 = vmatprep.subr.mxu0 %v1893
        %1995 = vmatpush1.msra.mxu0 %v1891
        %1996 = vmatprep.subr.mxu0 %v1899
        %1997 = vmatpush1.msra.mxu0 %v1897
        %1998 = vmatprep.subr.mxu0 %v1905
        %1999 = vmatpush1.msra.mxu0 %v1903
        %2000 = vmatprep.subr.mxu0 0.0
        %2001 = vmatpush1.msra.mxu0 0.0
        %2002 = vmatprep.subr.mxu0 0.0
        %2003 = vmatpush1.msra.mxu0 0.0
        %2004 = vmatprep.subr.mxu0 0.0
        %2005 = vmatpush1.msra.mxu0 0.0
        %2006 = vmatprep.subr.mxu0 0.0
        %2007 = vmatpush1.msra.mxu0 0.0
        %2008 = vmatprep.subr.mxu0 0.0
        %2009 = vmatpush1.msra.mxu0 0.0
        %2010 = vmatprep.subr.mxu0 0.0
        %2011 = vmatpush1.msra.mxu0 0.0
        %2012 = vmatprep.subr.mxu0 0.0
        %2013 = vmatpush1.msra.mxu0 0.0
        %2014 = vmatprep.subr.mxu0 0.0
        %2015 = vmatpush1.msra.mxu0 0.0
        %2016 = vmatprep.subr.mxu0 0.0
        %2017 = vmatpush1.msra.mxu0 0.0
        %2018 = vmatprep.subr.mxu0 0.0
        %2019 = vmatpush1.msra.mxu0 0.0
        %2020 = vmatprep.subr.mxu0 0.0
        %2021 = vmatpush1.msra.mxu0 0.0
        %2022 = vmatprep.subr.mxu0 0.0
        %2023 = vmatpush1.msra.mxu0 0.0
        %2024 = vmatprep.subr.mxu0 0.0
        %2025 = vmatpush1.msra.mxu0 0.0
        %2026 = vmatprep.subr.mxu0 0.0
        %2027 = vmatpush1.msra.mxu0 0.0
        %2028 = vmatprep.subr.mxu0 0.0
        %2029 = vmatpush1.msra.mxu0 0.0
        %2030 = vmatprep.subr.mxu0 0.0
        %2031 = vmatpush1.msra.mxu0 0.0
        %2032 = vmatprep.subr.mxu0 0.0
        %2033 = vmatpush1.msra.mxu0 0.0
        %2034 = vmatprep.subr.mxu0 0.0
        %2035 = vmatpush1.msra.mxu0 0.0
        %2036 = vmatprep.subr.mxu0 0.0
        %2037 = vmatpush1.msra.mxu0 0.0
        %2038 = vmatprep.subr.mxu0 0.0
        %2039 = vmatpush1.msra.mxu0 0.0
        %2040 = vmatprep.subr.mxu0 0.0
        %2041 = vmatpush1.msra.mxu0 0.0
        %2042 = vmatprep.subr.mxu0 0.0
        %2043 = vmatpush1.msra.mxu0 0.0
        %2044 = vmatprep.subr.mxu0 0.0
        %2045 = vmatpush1.msra.mxu0 0.0
        %2046 = vmatprep.subr.mxu0 0.0
        %2047 = vmatpush1.msra.mxu0 0.0
        %2048 = vmatprep.subr.mxu0 0.0
        %2049 = vmatpush1.msra.mxu0 0.0
        %2050 = vmatprep.subr.mxu0 0.0
        %2051 = vmatpush1.msra.mxu0 0.0
        %2052 = vmatprep.subr.mxu0 0.0
        %2053 = vmatpush1.msra.mxu0 0.0
        %2054 = vmatprep.subr.mxu0 0.0
        %2055 = vmatpush1.msra.mxu0 0.0
        %2056 = vmatprep.mubr.f32.mxu0 0.0
        %2057 = vmatmul.mubr.f32.gmra.mrb[0].mxu0 %v1919
        %v2058 = vpop.f32.mrb[0].mxu0
        %v2059 = vadd.f32 %v1917, %v2058
        %v2060 = vpop.f32.mrb[0].mxu0
        %v2061 = vadd.f32 %v1917, %v2060
        %2062 = vdwg.mxu0
        %v2067 = vcombine.low %v1988, %v1990
        %v2068 = vcombine.low %v2059, %v2061
        %v2070 = vunpack.c.l.s4 1966171168
        %v2071 = vunpack.c.0.s8 %v2070
        %v2072 = vlaneseq
        %v2073 = vshrl.u32 %v2072, 7
        %v2074 = vsub.s32 %v2071, %v2073
        %v2075 = vrot.slane %v2067, %v2074
        %v2077 = vunpack.c.l.s4 1966171168
        %v2078 = vunpack.c.0.s8 %v2077
        %v2079 = vlaneseq
        %v2080 = vshrl.u32 %v2079, 7
        %v2081 = vsub.s32 %v2078, %v2080
        %v2082 = vrot.slane %v2068, %v2081
        %v2083 = vcombine.low %v2075, %v2082
        %v2085 = vunpack.c.l.s4 1966171168
        %v2086 = vunpack.c.0.s8 %v2085
        %v2087 = vlaneseq
        %v2088 = vshrl.u32 %v2087, 7
        %v2089 = vsub.s32 %v2086, %v2088
        %v2090 = vrot.slane %v2083, %v2089
        %v2092 = vlaneseq
        %vm2093 = vcmp.ge.s32.totalorder %v2092, 0
        %vm2094 = vcmp.lt.s32.totalorder %v2092, 512
        %vm2095 = vmand %vm2093, %vm2094
        %2096 = vst.msk [vmem:[%s367] sm:$0xf] %vm2095, %v2090
        %s2097 = sand.u32 %s248, 1
        %s2098 = scalar_lea.sflag [#allocation4], %s2097
        %s2099 = sand.u32 %s248, 1
        %s2100 = smul.addr %s2099, 4
        %s2101 = scalar_lea.vmem [#allocation3], %s2100
        // Predicated region
        $region57: #{tpu_custom_call.1} parent=55 // pred_check
          %p2102 = pneg %p258
        $region58: #{tpu_custom_call.1} parent=55 // pred_check_branch
          %2104 = sbr.rel (%p2102) target = $region60
        $region59: #{tpu_custom_call.1} parent=55 // pred_region
          %s2105 = smul.u32 4, %s30
          %s2107 = ssub.s32 64, 64
          %2108 = vsyncadd %s2098, %s2107
          %s2109 = smul.addr %s29, 8
          %s2110 = sadd.s32 %s2105, %s2109
          %s2111 = smul.addr %s2110, 16
          %s2112 = scalar_lea.hbm %s9, %s2111
          %s2114 = sshll.u32 %s2101, 4
          %s2115 = int_to_ptr.vmem [resolvable:$true] %s2114
          %2117 = dma.vmem_to_hbm [thread:$0]  %s2115, 64, %s2112, %s2098
        $region60: #{tpu_custom_call.1} parent=55 // pred_fallthru
          _
      $region56: #{tpu_custom_call.1} parent=5 // pred_fallthru
        _
      %p2118 = scmp.le.s32.totalorder 2, %s20
      // Predicated region
      $region61: #{tpu_custom_call.1} parent=5 // pred_check
        %p2119 = pneg %p2118
      $region62: #{tpu_custom_call.1} parent=5 // pred_check_branch
        %2121 = sbr.rel (%p2119) target = $region64
      $region63: #{tpu_custom_call.1} parent=5 // pred_region
        %s2122 = ssub.s32 %s20, 2
        // Predicated region
        $region65: #{tpu_custom_call.1} parent=63 // pred_check
          %p2123 = pneg %p264
        $region66: #{tpu_custom_call.1} parent=63 // pred_check_branch
          %2125 = sbr.rel (%p2123) target = $region68
        $region67: #{tpu_custom_call.1} parent=63 // pred_region
          %s2126 = sand.u32 %s249, 1
          %s2127 = scalar_lea.sflag [#allocation4], %s2126
          %s2128 = sand.u32 %s249, 1
          %s2129 = smul.addr %s2128, 4
          %s2130 = scalar_lea.vmem [#allocation3], %s2129
          %2131 = dma.done %s2127, 64
        $region68: #{tpu_custom_call.1} parent=63 // pred_fallthru
          _
      $region64: #{tpu_custom_call.1} parent=5 // pred_fallthru
        _
    $region6: #{tpu_custom_call.1} parent=1 // loop_footer
      %s24 = sadd.s32 1, %s20
    $region7: #{tpu_custom_call.1} parent=1 // loop_footer_branch
      %19 = sbr.rel target = $region3
    $region8: #{tpu_custom_call.1} parent=1 // loop_exit
      _
    %2132 = vsyncpa [#allocation4], 1
    %s2133 = scalar_lea.sflag [#allocation4], 1
    %2134 = vsyncpa %s2133, 1

</llo_original>
